<compile_context>
chip_gen: v7x
topology: tpu7x:2x2x1
jax: 0.10.0
libtpu: 0.0.40
codegen_flags: <defaults>
</compile_context>

<pallas_src>
import functools

import jax
import jax.numpy as jnp
from jax import lax
from jax.experimental import pallas as pl
from jax.experimental.pallas import tpu as pltpu

BN_EPS = 1e-5


# -----------------------------------------------------------------------------
# Kernels
# -----------------------------------------------------------------------------
def _pool_proj_kernel(xw_ref, wpg_ref, bpg_ref, pg_ref):
    """[phi | g] = fused 1x1 conv followed by 2x2 max-pool, one batch per step.

    xw_ref : (1, 4, Ns, C) bf16   axis 1 = the 4 elements of each 2x2 window
    wpg_ref: (C, 2*Ci)     bf16   concatenated [w_phi | w_g]
    bpg_ref: (1, 2*Ci)     f32    concatenated [b_phi | b_g]
    pg_ref : (1, Ns, 2*Ci) bf16   concatenated [phi | g], pooled
    """
    acc = None
    for e in range(4):  # static unroll: 4 small MXU pushes, max-combined
        v = jnp.dot(xw_ref[0, e], wpg_ref[...],
                    preferred_element_type=jnp.float32)            # (Ns, 2*Ci)
        acc = v if acc is None else jnp.maximum(acc, v)
    # bias is identical across the 4 window elements -> add once, after the max
    pg_ref[0] = (acc + bpg_ref[...]).astype(pg_ref.dtype)


def _attention_kernel(xf_ref, phit_ref, g_ref, wt_ref, bt_ref, wW_ref, bW_ref,
                      out_ref):
    """Per (batch, N-tile) attention + W projection (BN folded) + residual.

    xf_ref  : (1, TILE_N, C) f32
    phit_ref: (1, Ci, Ns)    bf16   (phi, pre-transposed)
    g_ref   : (1, Ns, Ci)    bf16
    wt_ref  : (C, Ci)        bf16   (1/Ns folded in)     bt_ref : (1, Ci) f32
    wW_ref  : (Ci, C)        bf16   (eval-BN folded in)  bW_ref : (1, C)  f32
    """
    xf = xf_ref[0]                                                  # (TILE_N, C) f32
    xb = xf.astype(jnp.bfloat16)

    # theta = x @ (w_theta / Ns) + b_theta / Ns
    theta = jnp.dot(xb, wt_ref[...],
                    preferred_element_type=jnp.float32) + bt_ref[...]  # (TILE_N, Ci)

    # f_div_C = theta_scaled @ phi^T   (phi already transposed -> plain matmul)
    f = jnp.dot(theta.astype(jnp.bfloat16), phit_ref[0],
                preferred_element_type=jnp.float32)                 # (TILE_N, Ns)

    # y = f_div_C @ g
    y = jnp.dot(f.astype(jnp.bfloat16), g_ref[0],
                preferred_element_type=jnp.float32)                 # (TILE_N, Ci)

    # W projection with folded eval-mode BatchNorm, then residual (f32)
    wy = jnp.dot(y.astype(jnp.bfloat16), wW_ref[...],
                 preferred_element_type=jnp.float32) + bW_ref[...]  # (TILE_N, C)
    out_ref[0] = (wy + xf).astype(out_ref.dtype)


# -----------------------------------------------------------------------------
# Host wrapper
# -----------------------------------------------------------------------------
def _vmem_limit_bytes():
    """Generation-aware scoped-VMEM limit: ~75% of physical, capped at 100 MiB."""
    cap = 64 << 20
    try:
        cap = int(getattr(pltpu.get_tpu_info(), "vmem_capacity_bytes", cap))
    except Exception:
        pass
    return int(min(cap * 3 // 4, 100 << 20))


def _pick_tile_n(N, Ns, requested=None):
    """Largest sublane-aligned divisor of N, capped so the (tile, Ns) f32
    attention matrix stays well inside VMEM (v7x: 64 MiB physical)."""
    max_tile = max(8, min(512, (8 << 20) // max(4 * Ns, 1)))
    if (requested is not None and N % requested == 0
            and (requested % 8 == 0 or requested == N)):
        return requested
    for cand in (512, 256, 128, 64, 32, 16, 8):
        if cand <= max_tile and cand <= N and N % cand == 0:
            return cand
    return N  # tiny N: single full-extent tile (block == full dim)


def nonlocal_block_pallas(x_nchw, params, tile_n=None):
    """x_nchw: (B, C, H, W) float32. Returns z in NCHW, matching the PyTorch
    forward (eval-mode BatchNorm)."""
    B, C, H, W = x_nchw.shape
    # PyTorch MaxPool2d(2) floors (silently drops a trailing odd row/col);
    # this kernel requires even spatial sizes.
    assert H % 2 == 0 and W % 2 == 0, "H and W must be even for the 2x2 max-pool"
    Ci = params["w_theta"].shape[1]
    N = H * W
    Hs, Ws = H // 2, W // 2
    Ns = Hs * Ws
    # NOTE: for production shapes, C / Ci should be multiples of 128 (lane dim)
    # and N / Ns multiples of 8 for dense MXU use and unmasked stores; small test
    # shapes rely on "block == full dim", which is also legal.

    # ---- host-side parameter folding (inference-only algebra) -------------------
    inv_Ns = 1.0 / float(Ns)
    w_t = (params["w_theta"] * inv_Ns).astype(jnp.bfloat16)                  # (C, Ci)
    b_t = params["b_theta"] * inv_Ns                                         # (1, Ci)
    bn_scale = params["bn_gamma"] * lax.rsqrt(params["bn_var"] + BN_EPS)     # (1, C)
    w_W = (params["w_W"] * bn_scale).astype(jnp.bfloat16)                    # (Ci, C)
    b_W = (params["b_W"] - params["bn_mean"]) * bn_scale + params["bn_beta"]  # (1, C)
    # fused phi/g projection: one matmul, [phi | g] along the lane dim
    w_pg = jnp.concatenate([params["w_phi"], params["w_g"]], axis=1).astype(
        jnp.bfloat16)                                                        # (C, 2Ci)
    b_pg = jnp.concatenate([params["b_phi"], params["b_g"]], axis=1)         # (1, 2Ci)

    # ---- layout glue (pure reshapes/transposes, fused by XLA) -------------------
    x_nhwc = jnp.transpose(x_nchw, (0, 2, 3, 1))                             # (B,H,W,C)
    x_flat = x_nhwc.reshape(B, N, C)                                         # f32
    x_win = (x_nhwc.reshape(B, Hs, 2, Ws, 2, C)
             .transpose(0, 2, 4, 1, 3, 5)
             .reshape(B, 4, Ns, C)).astype(jnp.bfloat16)                     # (B,4,Ns,C)

    vmem_limit = _vmem_limit_bytes()

    # ---- prologue: [phi | g] = fused 1x1 conv + 2x2 max-pool --------------------
    pg = pl.pallas_call(
        _pool_proj_kernel,
        out_shape=jax.ShapeDtypeStruct((B, Ns, 2 * Ci), jnp.bfloat16),
        grid_spec=pltpu.PrefetchScalarGridSpec(
            num_scalar_prefetch=0,
            grid=(B,),
            in_specs=[pl.BlockSpec((1, 4, Ns, C), lambda b: (b, 0, 0, 0)),
                      pl.BlockSpec((C, 2 * Ci), lambda b: (0, 0)),
                      pl.BlockSpec((1, 2 * Ci), lambda b: (0, 0))],
            out_specs=pl.BlockSpec((1, Ns, 2 * Ci), lambda b: (b, 0, 0))),
        compiler_params=pltpu.CompilerParams(
            dimension_semantics=("parallel",),
            vmem_limit_bytes=vmem_limit),
    )(x_win, w_pg, b_pg)

    # Tiny one-time layout ops (B*Ns*Ci bf16 each): split [phi | g] and keep phi
    # pre-transposed so the hot-loop matmul needs no per-tile XLU transpose.
    phi_t = jnp.swapaxes(pg[:, :, :Ci], 1, 2)                                # (B,Ci,Ns)
    g = pg[:, :, Ci:]                                                        # (B,Ns,Ci)

    # ---- main: N-tiled attention + W projection + residual -----------------------
    tile_n = _pick_tile_n(N, Ns, tile_n)
    num_n = N // tile_n

    rep2 = lambda shape: pl.BlockSpec(shape, lambda b, n: (0,) * len(shape))
    out_flat = pl.pallas_call(
        _attention_kernel,
        out_shape=jax.ShapeDtypeStruct((B, N, C), x_nchw.dtype),
        grid_spec=pltpu.PrefetchScalarGridSpec(
            num_scalar_prefetch=0,
            grid=(B, num_n),
            in_specs=[pl.BlockSpec((1, tile_n, C), lambda b, n: (b, n, 0)),
                      pl.BlockSpec((1, Ci, Ns), lambda b, n: (b, 0, 0)),
                      pl.BlockSpec((1, Ns, Ci), lambda b, n: (b, 0, 0)),
                      rep2((C, Ci)), rep2((1, Ci)),
                      rep2((Ci, C)), rep2((1, C))],
            out_specs=pl.BlockSpec((1, tile_n, C), lambda b, n: (b, n, 0))),
        compiler_params=pltpu.CompilerParams(
            dimension_semantics=("parallel", "parallel"),
            vmem_limit_bytes=vmem_limit),
    )(x_flat, phi_t, g, w_t, b_t, w_W, b_W)
    # TODO(synk): for very large Ns, additionally tile Ns with a y-accumulator so
    # the (TILE_N, Ns) f matrix never fully materializes (relevant for v7x 64 MiB VMEM).

    return out_flat.reshape(B, H, W, C).transpose(0, 3, 1, 2)


# -----------------------------------------------------------------------------
# Pure-JAX reference (f32) mirroring the PyTorch forward (eval-mode BN)
# -----------------------------------------------------------------------------
def nonlocal_block_ref(x_nchw, params):
    B, C, H, W = x_nchw.shape
    Ci = params["w_theta"].shape[1]
    N = H * W
    Hs, Ws = H // 2, W // 2
    Ns = Hs * Ws

    x_flat = jnp.transpose(x_nchw, (0, 2, 3, 1)).reshape(B, N, C)

    theta = jnp.einsum("bnc,cd->bnd", x_flat, params["w_theta"]) + params["b_theta"]

    def conv_pool(w, b):
        full = jnp.einsum("bnc,cd->bnd", x_flat, w) + b                      # (B,N,Ci)
        full = full.transpose(0, 2, 1).reshape(B, Ci, H, W)
        pooled = full.reshape(B, Ci, Hs, 2, Ws, 2).max(axis=(3, 5))
        return pooled.reshape(B, Ci, Ns)                                     # (B,Ci,Ns)

    phi = conv_pool(params["w_phi"], params["b_phi"])                        # (B,Ci,Ns)
    g = conv_pool(params["w_g"], params["b_g"]).transpose(0, 2, 1)           # (B,Ns,Ci)

    f = jnp.einsum("bnd,bdm->bnm", theta, phi) / Ns                          # (B,N,Ns)
    y = jnp.einsum("bnm,bmd->bnd", f, g)                                     # (B,N,Ci)

    wy = jnp.einsum("bnd,dc->bnc", y, params["w_W"]) + params["b_W"]
    bn = ((wy - params["bn_mean"]) * lax.rsqrt(params["bn_var"] + BN_EPS)
          * params["bn_gamma"] + params["bn_beta"])
    z_flat = bn + x_flat
    return z_flat.reshape(B, H, W, C).transpose(0, 3, 1, 2)


def make_params(key, C, Ci, bn_gamma_val=0.0, bn_beta_val=0.0):
    """Synthetic parameters. PyTorch conv weight (out,in,1,1) is stored as (in,out)
    so the kernel can do x @ W. BN init follows the module: weight=0, bias=0."""
    ks = jax.random.split(key, 8)
    s = 0.1
    return dict(
        w_theta=s * jax.random.normal(ks[0], (C, Ci), jnp.float32),
        b_theta=s * jax.random.normal(ks[1], (1, Ci), jnp.float32),
        w_phi=s * jax.random.normal(ks[2], (C, Ci), jnp.float32),
        b_phi=s * jax.random.normal(ks[3], (1, Ci), jnp.float32),
        w_g=s * jax.random.normal(ks[4], (C, Ci), jnp.float32),
        b_g=s * jax.random.normal(ks[5], (1, Ci), jnp.float32),
        w_W=s * jax.random.normal(ks[6], (Ci, C), jnp.float32),
        b_W=s * jax.random.normal(ks[7], (1, C), jnp.float32),
        bn_gamma=jnp.full((1, C), bn_gamma_val, jnp.float32),
        bn_beta=jnp.full((1, C), bn_beta_val, jnp.float32),
        bn_mean=jnp.zeros((1, C), jnp.float32),
        bn_var=jnp.ones((1, C), jnp.float32),
    )


if __name__ == "__main__":
    B, C, H, W = 2, 4, 16, 16
    Ci = C // 2

    key = jax.random.PRNGKey(0)
    kx, kp = jax.random.split(key)
    x = jax.random.normal(kx, (B, C, H, W), jnp.float32)

    # tile_n=128 exercises the multi-tile path (N = 256 -> 2 tiles per batch)
    fwd = jax.jit(functools.partial(nonlocal_block_pallas, tile_n=128))

    # 1) module-faithful init: BN weight=0, bias=0  (W_y == 0, so z == x exactly)
    params_init = make_params(kp, C, Ci, bn_gamma_val=0.0, bn_beta_val=0.0)
    z0 = jax.block_until_ready(fwd(x, params_init))
    z0_ref = nonlocal_block_ref(x, params_init)
    assert jnp.allclose(z0, z0_ref, rtol=1e-4, atol=1e-4)

    # 2) non-degenerate BN (gamma=1) exercising the attention hot path.
    #    MXU operands are bf16 (f32 accumulation) -> relaxed tolerance vs f32 ref.
    params_nz = make_params(kp, C, Ci, bn_gamma_val=1.0, bn_beta_val=0.0)
    z1 = jax.block_until_ready(fwd(x, params_nz))
    z1_ref = nonlocal_block_ref(x, params_nz)
    assert jnp.allclose(z1, z1_ref, rtol=1e-2, atol=1e-2)

    print("KERNEL_OK")
</pallas_src>

<mosaic_0001>
module attributes {stable_mosaic.version = 11 : i64} {
  func.func @_pool_proj_kernel(%arg0: i32, %arg1: memref<1x4x64x4xbf16, #tpu.memory_space<vmem>>, %arg2: memref<4x4xbf16, #tpu.memory_space<vmem>>, %arg3: memref<1x4xf32, #tpu.memory_space<vmem>>, %arg4: memref<1x64x4xbf16, #tpu.memory_space<vmem>>) attributes {dimension_semantics = [#tpu.dimension_semantics<parallel>], iteration_bounds = array<i64: 2>, scalar_prefetch = 0 : i64, scratch_operands = 0 : i64, tpu.core_type = #tpu.core_type<tc>, window_params = [{transform_indices = @transform_0, window_bounds = array<i64: 1, 4, 64, 4>}, {pipeline_mode = #tpu.pipeline_mode<synchronous>, transform_indices = @transform_1, window_bounds = array<i64: 4, 4>}, {pipeline_mode = #tpu.pipeline_mode<synchronous>, transform_indices = @transform_2, window_bounds = array<i64: 1, 4>}, {transform_indices = @transform_3, window_bounds = array<i64: 1, 64, 4>}]} {
    %c0 = arith.constant 0 : index
    %c0_0 = arith.constant 0 : index
    %c0_1 = arith.constant 0 : index
    %c0_2 = arith.constant 0 : index
    %0 = vector.load %arg1[%c0, %c0_0, %c0_1, %c0_2] : memref<1x4x64x4xbf16, #tpu.memory_space<vmem>>, vector<1x1x64x4xbf16>
    %1 = vector.shape_cast %0 : vector<1x1x64x4xbf16> to vector<64x4xbf16>
    %c0_3 = arith.constant 0 : index
    %c0_4 = arith.constant 0 : index
    %2 = vector.load %arg2[%c0_3, %c0_4] : memref<4x4xbf16, #tpu.memory_space<vmem>>, vector<4x4xbf16>
    %cst = arith.constant dense<0.000000e+00> : vector<64x4xf32>
    %3 = tpu.matmul %1, %2, %cst {dimension_numbers = #tpu.dot_dimension_numbers<[1], [0], [0], [1], [0, 0, 1, 1], [], []>} : vector<64x4xbf16>, vector<4x4xbf16>, vector<64x4xf32> -> vector<64x4xf32>
    %c0_5 = arith.constant 0 : index
    %c1 = arith.constant 1 : index
    %c0_6 = arith.constant 0 : index
    %c0_7 = arith.constant 0 : index
    %4 = vector.load %arg1[%c0_5, %c1, %c0_6, %c0_7] : memref<1x4x64x4xbf16, #tpu.memory_space<vmem>>, vector<1x1x64x4xbf16>
    %5 = vector.shape_cast %4 : vector<1x1x64x4xbf16> to vector<64x4xbf16>
    %c0_8 = arith.constant 0 : index
    %c0_9 = arith.constant 0 : index
    %6 = vector.load %arg2[%c0_8, %c0_9] : memref<4x4xbf16, #tpu.memory_space<vmem>>, vector<4x4xbf16>
    %cst_10 = arith.constant dense<0.000000e+00> : vector<64x4xf32>
    %7 = tpu.matmul %5, %6, %cst_10 {dimension_numbers = #tpu.dot_dimension_numbers<[1], [0], [0], [1], [0, 0, 1, 1], [], []>} : vector<64x4xbf16>, vector<4x4xbf16>, vector<64x4xf32> -> vector<64x4xf32>
    %8 = arith.maximumf %3, %7 : vector<64x4xf32>
    %c0_11 = arith.constant 0 : index
    %c2 = arith.constant 2 : index
    %c0_12 = arith.constant 0 : index
    %c0_13 = arith.constant 0 : index
    %9 = vector.load %arg1[%c0_11, %c2, %c0_12, %c0_13] : memref<1x4x64x4xbf16, #tpu.memory_space<vmem>>, vector<1x1x64x4xbf16>
    %10 = vector.shape_cast %9 : vector<1x1x64x4xbf16> to vector<64x4xbf16>
    %c0_14 = arith.constant 0 : index
    %c0_15 = arith.constant 0 : index
    %11 = vector.load %arg2[%c0_14, %c0_15] : memref<4x4xbf16, #tpu.memory_space<vmem>>, vector<4x4xbf16>
    %cst_16 = arith.constant dense<0.000000e+00> : vector<64x4xf32>
    %12 = tpu.matmul %10, %11, %cst_16 {dimension_numbers = #tpu.dot_dimension_numbers<[1], [0], [0], [1], [0, 0, 1, 1], [], []>} : vector<64x4xbf16>, vector<4x4xbf16>, vector<64x4xf32> -> vector<64x4xf32>
    %13 = arith.maximumf %8, %12 : vector<64x4xf32>
    %c0_17 = arith.constant 0 : index
    %c3 = arith.constant 3 : index
    %c0_18 = arith.constant 0 : index
    %c0_19 = arith.constant 0 : index
    %14 = vector.load %arg1[%c0_17, %c3, %c0_18, %c0_19] : memref<1x4x64x4xbf16, #tpu.memory_space<vmem>>, vector<1x1x64x4xbf16>
    %15 = vector.shape_cast %14 : vector<1x1x64x4xbf16> to vector<64x4xbf16>
    %c0_20 = arith.constant 0 : index
    %c0_21 = arith.constant 0 : index
    %16 = vector.load %arg2[%c0_20, %c0_21] : memref<4x4xbf16, #tpu.memory_space<vmem>>, vector<4x4xbf16>
    %cst_22 = arith.constant dense<0.000000e+00> : vector<64x4xf32>
    %17 = tpu.matmul %15, %16, %cst_22 {dimension_numbers = #tpu.dot_dimension_numbers<[1], [0], [0], [1], [0, 0, 1, 1], [], []>} : vector<64x4xbf16>, vector<4x4xbf16>, vector<64x4xf32> -> vector<64x4xf32>
    %18 = arith.maximumf %13, %17 : vector<64x4xf32>
    %c0_23 = arith.constant 0 : index
    %c0_24 = arith.constant 0 : index
    %19 = vector.load %arg3[%c0_23, %c0_24] : memref<1x4xf32, #tpu.memory_space<vmem>>, vector<1x4xf32>
    %20 = vector.broadcast %19 : vector<1x4xf32> to vector<64x4xf32>
    %21 = arith.addf %18, %20 : vector<64x4xf32>
    %22 = arith.truncf %21 : vector<64x4xf32> to vector<64x4xbf16>
    %c0_25 = arith.constant 0 : index
    %c0_26 = arith.constant 0 : index
    %c0_27 = arith.constant 0 : index
    %23 = vector.load %arg4[%c0_25, %c0_26, %c0_27] : memref<1x64x4xbf16, #tpu.memory_space<vmem>>, vector<1x64x4xbf16>
    %24 = vector.shape_cast %23 : vector<1x64x4xbf16> to vector<64x4xbf16>
    %25 = vector.shape_cast %22 : vector<64x4xbf16> to vector<1x64x4xbf16>
    tpu.vector_store %arg4[%c0_25, %c0_26, %c0_27], %25 {strides = array<i32>} : memref<1x64x4xbf16, #tpu.memory_space<vmem>>, vector<1x64x4xbf16>,
    return
  }
  func.func @transform_0(%arg0: i32) -> (i32, i32, i32, i32) {
    %c0_i32 = arith.constant 0 : i32
    %c0_i32_0 = arith.constant 0 : i32
    %c0_i32_1 = arith.constant 0 : i32
    %c0_i32_2 = arith.constant 0 : i32
    return %arg0, %c0_i32, %c0_i32_0, %c0_i32_1 : i32, i32, i32, i32
  }
  func.func @transform_1(%arg0: i32) -> (i32, i32) {
    %c0_i32 = arith.constant 0 : i32
    %c0_i32_0 = arith.constant 0 : i32
    %c0_i32_1 = arith.constant 0 : i32
    return %c0_i32, %c0_i32_0 : i32, i32
  }
  func.func @transform_2(%arg0: i32) -> (i32, i32) {
    %c0_i32 = arith.constant 0 : i32
    %c0_i32_0 = arith.constant 0 : i32
    %c0_i32_1 = arith.constant 0 : i32
    return %c0_i32, %c0_i32_0 : i32, i32
  }
  func.func @transform_3(%arg0: i32) -> (i32, i32, i32) {
    %c0_i32 = arith.constant 0 : i32
    %c0_i32_0 = arith.constant 0 : i32
    %c0_i32_1 = arith.constant 0 : i32
    return %arg0, %c0_i32, %c0_i32_0 : i32, i32, i32
  }
}

module attributes {stable_mosaic.version = 11 : i64} {
  func.func @_attention_kernel(%arg0: i32, %arg1: i32, %arg2: memref<1x128x4xf32, #tpu.memory_space<vmem>>, %arg3: memref<1x2x64xbf16, #tpu.memory_space<vmem>>, %arg4: memref<1x64x2xbf16, #tpu.memory_space<vmem>>, %arg5: memref<4x2xbf16, #tpu.memory_space<vmem>>, %arg6: memref<1x2xf32, #tpu.memory_space<vmem>>, %arg7: memref<2x4xbf16, #tpu.memory_space<vmem>>, %arg8: memref<1x4xf32, #tpu.memory_space<vmem>>, %arg9: memref<1x128x4xf32, #tpu.memory_space<vmem>>) attributes {dimension_semantics = [#tpu.dimension_semantics<parallel>, #tpu.dimension_semantics<parallel>], iteration_bounds = array<i64: 2, 2>, scalar_prefetch = 0 : i64, scratch_operands = 0 : i64, tpu.core_type = #tpu.core_type<tc>, window_params = [{transform_indices = @transform_0, window_bounds = array<i64: 1, 128, 4>}, {transform_indices = @transform_1, window_bounds = array<i64: 1, 2, 64>}, {transform_indices = @transform_2, window_bounds = array<i64: 1, 64, 2>}, {pipeline_mode = #tpu.pipeline_mode<synchronous>, transform_indices = @transform_3, window_bounds = array<i64: 4, 2>}, {pipeline_mode = #tpu.pipeline_mode<synchronous>, transform_indices = @transform_4, window_bounds = array<i64: 1, 2>}, {pipeline_mode = #tpu.pipeline_mode<synchronous>, transform_indices = @transform_5, window_bounds = array<i64: 2, 4>}, {pipeline_mode = #tpu.pipeline_mode<synchronous>, transform_indices = @transform_6, window_bounds = array<i64: 1, 4>}, {transform_indices = @transform_7, window_bounds = array<i64: 1, 128, 4>}]} {
    %c0 = arith.constant 0 : index
    %c0_0 = arith.constant 0 : index
    %c0_1 = arith.constant 0 : index
    %0 = vector.load %arg2[%c0, %c0_0, %c0_1] : memref<1x128x4xf32, #tpu.memory_space<vmem>>, vector<1x128x4xf32>
    %1 = vector.shape_cast %0 : vector<1x128x4xf32> to vector<128x4xf32>
    %2 = arith.truncf %1 : vector<128x4xf32> to vector<128x4xbf16>
    %c0_2 = arith.constant 0 : index
    %c0_3 = arith.constant 0 : index
    %3 = vector.load %arg5[%c0_2, %c0_3] : memref<4x2xbf16, #tpu.memory_space<vmem>>, vector<4x2xbf16>
    %cst = arith.constant dense<0.000000e+00> : vector<128x2xf32>
    %4 = tpu.matmul %2, %3, %cst {dimension_numbers = #tpu.dot_dimension_numbers<[1], [0], [0], [1], [0, 0, 1, 1], [], []>} : vector<128x4xbf16>, vector<4x2xbf16>, vector<128x2xf32> -> vector<128x2xf32>
    %c0_4 = arith.constant 0 : index
    %c0_5 = arith.constant 0 : index
    %5 = vector.load %arg6[%c0_4, %c0_5] : memref<1x2xf32, #tpu.memory_space<vmem>>, vector<1x2xf32>
    %6 = vector.broadcast %5 : vector<1x2xf32> to vector<128x2xf32>
    %7 = arith.addf %4, %6 : vector<128x2xf32>
    %8 = arith.truncf %7 : vector<128x2xf32> to vector<128x2xbf16>
    %c0_6 = arith.constant 0 : index
    %c0_7 = arith.constant 0 : index
    %c0_8 = arith.constant 0 : index
    %9 = vector.load %arg3[%c0_6, %c0_7, %c0_8] : memref<1x2x64xbf16, #tpu.memory_space<vmem>>, vector<1x2x64xbf16>
    %10 = vector.shape_cast %9 : vector<1x2x64xbf16> to vector<2x64xbf16>
    %cst_9 = arith.constant dense<0.000000e+00> : vector<128x64xf32>
    %11 = tpu.matmul %8, %10, %cst_9 {dimension_numbers = #tpu.dot_dimension_numbers<[1], [0], [0], [1], [0, 0, 1, 1], [], []>} : vector<128x2xbf16>, vector<2x64xbf16>, vector<128x64xf32> -> vector<128x64xf32>
    %12 = arith.truncf %11 : vector<128x64xf32> to vector<128x64xbf16>
    %c0_10 = arith.constant 0 : index
    %c0_11 = arith.constant 0 : index
    %c0_12 = arith.constant 0 : index
    %13 = vector.load %arg4[%c0_10, %c0_11, %c0_12] : memref<1x64x2xbf16, #tpu.memory_space<vmem>>, vector<1x64x2xbf16>
    %14 = vector.shape_cast %13 : vector<1x64x2xbf16> to vector<64x2xbf16>
    %cst_13 = arith.constant dense<0.000000e+00> : vector<128x2xf32>
    %15 = tpu.matmul %12, %14, %cst_13 {dimension_numbers = #tpu.dot_dimension_numbers<[1], [0], [0], [1], [0, 0, 1, 1], [], []>} : vector<128x64xbf16>, vector<64x2xbf16>, vector<128x2xf32> -> vector<128x2xf32>
    %16 = arith.truncf %15 : vector<128x2xf32> to vector<128x2xbf16>
    %c0_14 = arith.constant 0 : index
    %c0_15 = arith.constant 0 : index
    %17 = vector.load %arg7[%c0_14, %c0_15] : memref<2x4xbf16, #tpu.memory_space<vmem>>, vector<2x4xbf16>
    %cst_16 = arith.constant dense<0.000000e+00> : vector<128x4xf32>
    %18 = tpu.matmul %16, %17, %cst_16 {dimension_numbers = #tpu.dot_dimension_numbers<[1], [0], [0], [1], [0, 0, 1, 1], [], []>} : vector<128x2xbf16>, vector<2x4xbf16>, vector<128x4xf32> -> vector<128x4xf32>
    %c0_17 = arith.constant 0 : index
    %c0_18 = arith.constant 0 : index
    %19 = vector.load %arg8[%c0_17, %c0_18] : memref<1x4xf32, #tpu.memory_space<vmem>>, vector<1x4xf32>
    %20 = vector.broadcast %19 : vector<1x4xf32> to vector<128x4xf32>
    %21 = arith.addf %18, %20 : vector<128x4xf32>
    %22 = arith.addf %21, %1 : vector<128x4xf32>
    %c0_19 = arith.constant 0 : index
    %c0_20 = arith.constant 0 : index
    %c0_21 = arith.constant 0 : index
    %23 = vector.load %arg9[%c0_19, %c0_20, %c0_21] : memref<1x128x4xf32, #tpu.memory_space<vmem>>, vector<1x128x4xf32>
    %24 = vector.shape_cast %23 : vector<1x128x4xf32> to vector<128x4xf32>
    %25 = vector.shape_cast %22 : vector<128x4xf32> to vector<1x128x4xf32>
    tpu.vector_store %arg9[%c0_19, %c0_20, %c0_21], %25 {strides = array<i32>} : memref<1x128x4xf32, #tpu.memory_space<vmem>>, vector<1x128x4xf32>,
    return
  }
  func.func @transform_0(%arg0: i32, %arg1: i32) -> (i32, i32, i32) {
    %c0_i32 = arith.constant 0 : i32
    %c0_i32_0 = arith.constant 0 : i32
    return %arg0, %arg1, %c0_i32 : i32, i32, i32
  }
  func.func @transform_1(%arg0: i32, %arg1: i32) -> (i32, i32, i32) {
    %c0_i32 = arith.constant 0 : i32
    %c0_i32_0 = arith.constant 0 : i32
    %c0_i32_1 = arith.constant 0 : i32
    return %arg0, %c0_i32, %c0_i32_0 : i32, i32, i32
  }
  func.func @transform_2(%arg0: i32, %arg1: i32) -> (i32, i32, i32) {
    %c0_i32 = arith.constant 0 : i32
    %c0_i32_0 = arith.constant 0 : i32
    %c0_i32_1 = arith.constant 0 : i32
    return %arg0, %c0_i32, %c0_i32_0 : i32, i32, i32
  }
  func.func @transform_3(%arg0: i32, %arg1: i32) -> (i32, i32) {
    %c0_i32 = arith.constant 0 : i32
    %c0_i32_0 = arith.constant 0 : i32
    %c0_i32_1 = arith.constant 0 : i32
    return %c0_i32, %c0_i32_0 : i32, i32
  }
  func.func @transform_4(%arg0: i32, %arg1: i32) -> (i32, i32) {
    %c0_i32 = arith.constant 0 : i32
    %c0_i32_0 = arith.constant 0 : i32
    %c0_i32_1 = arith.constant 0 : i32
    return %c0_i32, %c0_i32_0 : i32, i32
  }
  func.func @transform_5(%arg0: i32, %arg1: i32) -> (i32, i32) {
    %c0_i32 = arith.constant 0 : i32
    %c0_i32_0 = arith.constant 0 : i32
    %c0_i32_1 = arith.constant 0 : i32
    return %c0_i32, %c0_i32_0 : i32, i32
  }
  func.func @transform_6(%arg0: i32, %arg1: i32) -> (i32, i32) {
    %c0_i32 = arith.constant 0 : i32
    %c0_i32_0 = arith.constant 0 : i32
    %c0_i32_1 = arith.constant 0 : i32
    return %c0_i32, %c0_i32_0 : i32, i32
  }
  func.func @transform_7(%arg0: i32, %arg1: i32) -> (i32, i32, i32) {
    %c0_i32 = arith.constant 0 : i32
    %c0_i32_0 = arith.constant 0 : i32
    return %arg0, %arg1, %c0_i32 : i32, i32, i32
  }
}

</mosaic_0001>

<llo_original>
// kernel: nonlocal_block_pallas.2
$region0: #{nonlocal_block_pallas.2}
  #allocation0 [shape = 'u32[]', space=smem, size = 0x4, offset = 0x4, fixed_abs, tag = 'smem constant byte address 0x4 - core index']
  #allocation1 [shape = 'u32[144,128]{1,0:T(1,128)}', space=vmem, size = 0x12000, scoped, tag = 'internal scratch']
  %s0 = inlined_call_operand.vmem [shape: bf16[2,4,64,4], index: 0, kind: input, shape index: {}]
  %s1 = inlined_call_operand.vmem [shape: bf16[4,4], index: 1, kind: input, shape index: {}]
  %s2 = inlined_call_operand.vmem [shape: f32[1,4], index: 2, kind: input, shape index: {}]
  %s3 = inlined_call_operand.vmem [shape: bf16[2,64,4], index: 3, kind: output, shape index: {}]
  %s4 = sld [smem:[#allocation0]]
  $region45: #{nonlocal_block_pallas.2} parent=0
    _
  %s6 = ssub.s32 1, %s4
  %s7 = scalar_select 0, %s6, %s4
  loop: start=0, step=1, limit=4
  $region2: #{nonlocal_block_pallas.2} parent=0 // loop_pre_header
    _
  $region3: #{nonlocal_block_pallas.2} parent=0 // loop_header
    %s9 = sphi 0, %s13
    %p10 = scmp.ge.s32.totalorder %s9, 4
    %s19 = sphi 0, %s21
    %s22 = sphi 0, %s19
    %s23 = sphi 0, %s22
    %s39 = sphi 0, %s23
    %s43 = sphi 0, %s43
    %s45 = sphi 0, %s43
    %s46 = sphi 0, %s45
    %s60 = sphi 0, %s46
    %s64 = sphi 0, %s64
    %s66 = sphi 0, %s64
    %s67 = sphi 0, %s66
    %s81 = sphi 0, %s67
    %s87 = sphi 0, %s89
    %s90 = sphi 0, %s87
    %s91 = sphi 0, %s90
    %s107 = sphi 0, %s91
  $region4: #{nonlocal_block_pallas.2} parent=0 // loop_header_branch
    %12 = sbr.rel (%p10) target = $region8
  $region5: #{nonlocal_block_pallas.2} parent=0 // loop_body
    %s14 = ssub.s32 %s9, 1
    %s15 = ssub.s32 %s9, 2
    %s16 = sadd.s32 %s9, 1
    %s17 = ssub.s32 %s9, %s16
    %p18 = scmp.eq.s32.totalorder %s17, 0
    %s20 = sadd.s32 %s19, 1
    %s21 = scalar_select %p18, %s19, %s20
    %p24 = pneg %p18
    %p25 = scmp.eq.s32.totalorder %s9, 1
    %p26 = por %p24, %p25
    %p27 = scmp.ne.s32.totalorder %s19, %s22
    %p28 = scmp.eq.s32.totalorder %s9, 0
    %p29 = por %p27, %p28
    %p30 = scmp.ne.s32.totalorder %s19, %s22
    %p31 = scmp.eq.s32.totalorder %s14, 1
    %p32 = por %p30, %p31
    %p33 = scmp.ne.s32.totalorder %s22, %s23
    %p34 = scmp.eq.s32.totalorder %s14, 0
    %p35 = por %p33, %p34
    %p36 = scmp.ne.s32.totalorder %s22, %s23
    %p37 = scmp.eq.s32.totalorder %s15, 1
    %p38 = por %p36, %p37
    %p40 = scmp.ne.s32.totalorder %s23, %s39
    %p41 = scmp.eq.s32.totalorder %s15, 0
    %p42 = por %p40, %p41
    %s44 = sadd.s32 %s43, 1
    %p47 = scmp.eq.s32.totalorder %s9, 1
    %p48 = scmp.ne.s32.totalorder %s43, %s45
    %p49 = scmp.eq.s32.totalorder %s9, 0
    %p50 = por %p48, %p49
    %p51 = scmp.ne.s32.totalorder %s43, %s45
    %p52 = scmp.eq.s32.totalorder %s14, 1
    %p53 = por %p51, %p52
    %p54 = scmp.ne.s32.totalorder %s45, %s46
    %p55 = scmp.eq.s32.totalorder %s14, 0
    %p56 = por %p54, %p55
    %p57 = scmp.ne.s32.totalorder %s45, %s46
    %p58 = scmp.eq.s32.totalorder %s15, 1
    %p59 = por %p57, %p58
    %p61 = scmp.ne.s32.totalorder %s46, %s60
    %p62 = scmp.eq.s32.totalorder %s15, 0
    %p63 = por %p61, %p62
    %s65 = sadd.s32 %s64, 1
    %p68 = scmp.eq.s32.totalorder %s9, 1
    %p69 = scmp.ne.s32.totalorder %s64, %s66
    %p70 = scmp.eq.s32.totalorder %s9, 0
    %p71 = por %p69, %p70
    %p72 = scmp.ne.s32.totalorder %s64, %s66
    %p73 = scmp.eq.s32.totalorder %s14, 1
    %p74 = por %p72, %p73
    %p75 = scmp.ne.s32.totalorder %s66, %s67
    %p76 = scmp.eq.s32.totalorder %s14, 0
    %p77 = por %p75, %p76
    %p78 = scmp.ne.s32.totalorder %s66, %s67
    %p79 = scmp.eq.s32.totalorder %s15, 1
    %p80 = por %p78, %p79
    %p82 = scmp.ne.s32.totalorder %s67, %s81
    %p83 = scmp.eq.s32.totalorder %s15, 0
    %p84 = por %p82, %p83
    %s85 = ssub.s32 %s9, %s16
    %p86 = scmp.eq.s32.totalorder %s85, 0
    %s88 = sadd.s32 %s87, 1
    %s89 = scalar_select %p86, %s87, %s88
    %p92 = pneg %p86
    %p93 = scmp.eq.s32.totalorder %s9, 1
    %p94 = por %p92, %p93
    %p95 = scmp.ne.s32.totalorder %s87, %s90
    %p96 = scmp.eq.s32.totalorder %s9, 0
    %p97 = por %p95, %p96
    %p98 = scmp.ne.s32.totalorder %s87, %s90
    %p99 = scmp.eq.s32.totalorder %s14, 1
    %p100 = por %p98, %p99
    %p101 = scmp.ne.s32.totalorder %s90, %s91
    %p102 = scmp.eq.s32.totalorder %s14, 0
    %p103 = por %p101, %p102
    %p104 = scmp.ne.s32.totalorder %s90, %s91
    %p105 = scmp.eq.s32.totalorder %s15, 1
    %p106 = por %p104, %p105
    %p108 = scmp.ne.s32.totalorder %s91, %s107
    %p109 = scmp.eq.s32.totalorder %s15, 0
    %p110 = por %p108, %p109
    %p111 = scmp.le.s32.totalorder 1, %s9
    %p112 = scmp.lt.s32.totalorder %s9, 3
    %p113 = pnand %p111, %p112
    %p114 = pneg %p113
    // Predicated region
    $region9: #{nonlocal_block_pallas.2} parent=5 // pred_check
      _
    $region10: #{nonlocal_block_pallas.2} parent=5 // pred_check_branch
      %116 = sbr.rel (%p113) target = $region12
    $region11: #{nonlocal_block_pallas.2} parent=5 // pred_region
      %s117 = ssub.s32 %s9, 1
      // Predicated region
      $region13: #{nonlocal_block_pallas.2} parent=11 // pred_check
        %p118 = pneg %p56
      $region14: #{nonlocal_block_pallas.2} parent=11 // pred_check_branch
        %120 = sbr.rel (%p118) target = $region16
      $region15: #{nonlocal_block_pallas.2} parent=11 // pred_region
        _
      $region16: #{nonlocal_block_pallas.2} parent=11 // pred_fallthru
        _
      // Predicated region
      $region17: #{nonlocal_block_pallas.2} parent=11 // pred_check
        %p121 = pneg %p77
      $region18: #{nonlocal_block_pallas.2} parent=11 // pred_check_branch
        %123 = sbr.rel (%p121) target = $region20
      $region19: #{nonlocal_block_pallas.2} parent=11 // pred_region
        _
      $region20: #{nonlocal_block_pallas.2} parent=11 // pred_fallthru
        _
    $region12: #{nonlocal_block_pallas.2} parent=5 // pred_fallthru
      _
    %p124 = scmp.lt.s32.totalorder %s9, 2
    // Predicated region
    $region21: #{nonlocal_block_pallas.2} parent=5 // pred_check
      %p125 = pneg %p124
    $region22: #{nonlocal_block_pallas.2} parent=5 // pred_check_branch
      %127 = sbr.rel (%p125) target = $region24
    $region23: #{nonlocal_block_pallas.2} parent=5 // pred_region
      // Predicated region
      $region25: #{nonlocal_block_pallas.2} parent=23 // pred_check
        %p128 = pneg %p29
      $region26: #{nonlocal_block_pallas.2} parent=23 // pred_check_branch
        %130 = sbr.rel (%p128) target = $region28
      $region27: #{nonlocal_block_pallas.2} parent=23 // pred_region
        %p131 = scmp.lt.s32.totalorder %s9, 1
        %s132 = scalar_select %p131, %s9, 1
        %s133 = smul.addr %s132, 32
        %s134 = smul.addr %s133, 4
        %s135 = scalar_lea.vmem %s0, %s134
      $region28: #{nonlocal_block_pallas.2} parent=23 // pred_fallthru
        _
    $region24: #{nonlocal_block_pallas.2} parent=5 // pred_fallthru
      _
    %p136 = scmp.le.s32.totalorder 1, %s9
    %p137 = scmp.lt.s32.totalorder %s9, 3
    %p138 = pnand %p136, %p137
    %p139 = pneg %p138
    // Predicated region
    $region29: #{nonlocal_block_pallas.2} parent=5 // pred_check
      _
    $region30: #{nonlocal_block_pallas.2} parent=5 // pred_check_branch
      %141 = sbr.rel (%p138) target = $region32
    $region31: #{nonlocal_block_pallas.2} parent=5 // pred_region
      %s142 = ssub.s32 %s9, 1
      %p143 = scmp.lt.s32.totalorder %s14, 1
      %s144 = scalar_select %p143, %s14, 1
      %s145 = smul.addr %s144, 32
      %s146 = smul.addr %s145, 4
      %s147 = scalar_lea.vmem %s0, %s146
      %p148 = pneg %p35
      %p149 = pneg %p32
      %p150 = pneg %p56
      %p151 = pneg %p53
      %p152 = pneg %p77
      %p153 = pneg %p74
      %p154 = pneg %p103
      %p155 = pneg %p100
      %p156 = scmp.lt.s32.totalorder %s14, 1
      %s157 = scalar_select %p156, %s14, 1
      %s158 = smul.addr %s157, 8
      %s159 = smul.addr %s158, 4
      %s160 = scalar_lea.vmem %s3, %s159
      %p161 = scmp.lt.s32.totalorder %s14, 1
      %s162 = scalar_select %p161, %s14, 1
      %s163 = smul.addr %s162, 32
      %s164 = smul.addr %s163, 4
      %s165 = scalar_lea.vmem %s0, %s164
      %p166 = scmp.lt.s32.totalorder %s14, 1
      %s167 = scalar_select %p166, %s14, 1
      %s168 = smul.addr %s167, 8
      %s169 = smul.addr %s168, 4
      %s170 = scalar_lea.vmem %s3, %s169
      %v172 = vld [vmem:[%s165] sm:$0xf]
      %v173 = vld [vmem:[%s165 + $0x4] sm:$0xf]
      %v174 = vld [vmem:[%s165 + $0x8] sm:$0xf]
      %v175 = vld [vmem:[%s165 + $0xc] sm:$0xf]
      %v176 = vld [vmem:[%s165 + $0x10] sm:$0xf]
      %v177 = vld [vmem:[%s165 + $0x14] sm:$0xf]
      %v178 = vld [vmem:[%s165 + $0x18] sm:$0xf]
      %v179 = vld [vmem:[%s165 + $0x1c] sm:$0xf]
      %v180 = vld [vmem:[%s1] sm:$0x3]
      %v189 = vunpack.c.l.b16 %v172
      %v190 = vunpack.c.l.b16 %v173
      %v191 = vunpack.c.l.b16 %v174
      %v192 = vunpack.c.l.b16 %v175
      %v193 = vunpack.c.l.b16 %v176
      %v194 = vunpack.c.l.b16 %v177
      %v195 = vunpack.c.l.b16 %v178
      %v196 = vunpack.c.l.b16 %v179
      %v197 = vpack.c.b16 %v190, %v189
      %v198 = vpack.c.b16 %v192, %v191
      %v199 = vpack.c.b16 %v194, %v193
      %v200 = vpack.c.b16 %v196, %v195
      %vm201 = vcmask 31744
      %v203 = vsel %vm201, %v197, 0
      %v206 = vsel %vm201, %v198, 0
      %v209 = vsel %vm201, %v199, 0
      %v212 = vsel %vm201, %v200, 0
      %vm214 = vcmask 1041408
      %v216 = vsel %vm214, %v180, 0
      %218 = vmatprep.subr.bf16.mxu0 0
      %219 = vmatpush1.bf16.msra.mxu0 %v216
      %220 = vmatprep.subr.bf16.mxu0 0
      %221 = vmatpush1.bf16.msra.mxu0 0
      %222 = vmatprep.subr.bf16.mxu0 0
      %223 = vmatpush1.bf16.msra.mxu0 0
      %224 = vmatprep.subr.bf16.mxu0 0
      %225 = vmatpush1.bf16.msra.mxu0 0
      %226 = vmatprep.subr.bf16.mxu0 0
      %227 = vmatpush1.bf16.msra.mxu0 0
      %228 = vmatprep.subr.bf16.mxu0 0
      %229 = vmatpush1.bf16.msra.mxu0 0
      %230 = vmatprep.subr.bf16.mxu0 0
      %231 = vmatpush1.bf16.msra.mxu0 0
      %232 = vmatprep.subr.bf16.mxu0 0
      %233 = vmatpush1.bf16.msra.mxu0 0
      %234 = vmatprep.subr.bf16.mxu0 0
      %235 = vmatpush1.bf16.msra.mxu0 0
      %236 = vmatprep.subr.bf16.mxu0 0
      %237 = vmatpush1.bf16.msra.mxu0 0
      %238 = vmatprep.subr.bf16.mxu0 0
      %239 = vmatpush1.bf16.msra.mxu0 0
      %240 = vmatprep.subr.bf16.mxu0 0
      %241 = vmatpush1.bf16.msra.mxu0 0
      %242 = vmatprep.subr.bf16.mxu0 0
      %243 = vmatpush1.bf16.msra.mxu0 0
      %244 = vmatprep.subr.bf16.mxu0 0
      %245 = vmatpush1.bf16.msra.mxu0 0
      %246 = vmatprep.subr.bf16.mxu0 0
      %247 = vmatpush1.bf16.msra.mxu0 0
      %248 = vmatprep.subr.bf16.mxu0 0
      %249 = vmatpush1.bf16.msra.mxu0 0
      %250 = vmatprep.mubr.bf16.mxu0 0
      %251 = vmatmul.mubr.bf16.gmra.mrb[0].mxu0 %v203
      %v252 = vpop.f32.mrb[0].mxu0
      %v253 = vadd.f32 0.0, %v252
      %v254 = vpop.f32.mrb[0].mxu0
      %v255 = vpop.f32.mrb[0].mxu0
      %v256 = vadd.f32 0.0, %v255
      %v257 = vpop.f32.mrb[0].mxu0
      %258 = vmatprep.mubr.bf16.mxu0 0
      %259 = vmatmul.mubr.bf16.gmra.mrb[0].mxu0 %v206
      %v260 = vpop.f32.mrb[0].mxu0
      %v261 = vadd.f32 0.0, %v260
      %v262 = vpop.f32.mrb[0].mxu0
      %v263 = vpop.f32.mrb[0].mxu0
      %v264 = vadd.f32 0.0, %v263
      %v265 = vpop.f32.mrb[0].mxu0
      %266 = vmatprep.mubr.bf16.mxu0 0
      %267 = vmatmul.mubr.bf16.gmra.mrb[0].mxu0 %v209
      %v268 = vpop.f32.mrb[0].mxu0
      %v269 = vadd.f32 0.0, %v268
      %v270 = vpop.f32.mrb[0].mxu0
      %v271 = vpop.f32.mrb[0].mxu0
      %v272 = vadd.f32 0.0, %v271
      %v273 = vpop.f32.mrb[0].mxu0
      %274 = vmatprep.mubr.bf16.mxu0 0
      %275 = vmatmul.mubr.bf16.gmra.mrb[0].mxu0 %v212
      %v276 = vpop.f32.mrb[0].mxu0
      %v277 = vadd.f32 0.0, %v276
      %v278 = vpop.f32.mrb[0].mxu0
      %v279 = vpop.f32.mrb[0].mxu0
      %v280 = vadd.f32 0.0, %v279
      %v281 = vpop.f32.mrb[0].mxu0
      %282 = vdwg.mxu0
      %s283 = scalar_lea.vmem %s165, 32
      %v284 = vld [vmem:[%s283] sm:$0xf]
      %v285 = vld [vmem:[%s283 + $0x4] sm:$0xf]
      %v286 = vld [vmem:[%s283 + $0x8] sm:$0xf]
      %v287 = vld [vmem:[%s283 + $0xc] sm:$0xf]
      %v288 = vld [vmem:[%s283 + $0x10] sm:$0xf]
      %v289 = vld [vmem:[%s283 + $0x14] sm:$0xf]
      %v290 = vld [vmem:[%s283 + $0x18] sm:$0xf]
      %v291 = vld [vmem:[%s283 + $0x1c] sm:$0xf]
      %v300 = vunpack.c.l.b16 %v284
      %v301 = vunpack.c.l.b16 %v285
      %v302 = vunpack.c.l.b16 %v286
      %v303 = vunpack.c.l.b16 %v287
      %v304 = vunpack.c.l.b16 %v288
      %v305 = vunpack.c.l.b16 %v289
      %v306 = vunpack.c.l.b16 %v290
      %v307 = vunpack.c.l.b16 %v291
      %v308 = vpack.c.b16 %v301, %v300
      %v309 = vpack.c.b16 %v303, %v302
      %v310 = vpack.c.b16 %v305, %v304
      %v311 = vpack.c.b16 %v307, %v306
      %v313 = vsel %vm201, %v308, 0
      %v316 = vsel %vm201, %v309, 0
      %v319 = vsel %vm201, %v310, 0
      %v322 = vsel %vm201, %v311, 0
      %324 = vmatprep.subr.bf16.mxu0 0
      %325 = vmatpush1.bf16.msra.mxu0 %v216
      %326 = vmatprep.subr.bf16.mxu0 0
      %327 = vmatpush1.bf16.msra.mxu0 0
      %328 = vmatprep.subr.bf16.mxu0 0
      %329 = vmatpush1.bf16.msra.mxu0 0
      %330 = vmatprep.subr.bf16.mxu0 0
      %331 = vmatpush1.bf16.msra.mxu0 0
      %332 = vmatprep.subr.bf16.mxu0 0
      %333 = vmatpush1.bf16.msra.mxu0 0
      %334 = vmatprep.subr.bf16.mxu0 0
      %335 = vmatpush1.bf16.msra.mxu0 0
      %336 = vmatprep.subr.bf16.mxu0 0
      %337 = vmatpush1.bf16.msra.mxu0 0
      %338 = vmatprep.subr.bf16.mxu0 0
      %339 = vmatpush1.bf16.msra.mxu0 0
      %340 = vmatprep.subr.bf16.mxu0 0
      %341 = vmatpush1.bf16.msra.mxu0 0
      %342 = vmatprep.subr.bf16.mxu0 0
      %343 = vmatpush1.bf16.msra.mxu0 0
      %344 = vmatprep.subr.bf16.mxu0 0
      %345 = vmatpush1.bf16.msra.mxu0 0
      %346 = vmatprep.subr.bf16.mxu0 0
      %347 = vmatpush1.bf16.msra.mxu0 0
      %348 = vmatprep.subr.bf16.mxu0 0
      %349 = vmatpush1.bf16.msra.mxu0 0
      %350 = vmatprep.subr.bf16.mxu0 0
      %351 = vmatpush1.bf16.msra.mxu0 0
      %352 = vmatprep.subr.bf16.mxu0 0
      %353 = vmatpush1.bf16.msra.mxu0 0
      %354 = vmatprep.subr.bf16.mxu0 0
      %355 = vmatpush1.bf16.msra.mxu0 0
      %356 = vmatprep.mubr.bf16.mxu0 0
      %357 = vmatmul.mubr.bf16.gmra.mrb[0].mxu0 %v313
      %v358 = vpop.f32.mrb[0].mxu0
      %v359 = vadd.f32 0.0, %v358
      %v360 = vpop.f32.mrb[0].mxu0
      %v361 = vpop.f32.mrb[0].mxu0
      %v362 = vadd.f32 0.0, %v361
      %v363 = vpop.f32.mrb[0].mxu0
      %364 = vmatprep.mubr.bf16.mxu0 0
      %365 = vmatmul.mubr.bf16.gmra.mrb[0].mxu0 %v316
      %v366 = vpop.f32.mrb[0].mxu0
      %v367 = vadd.f32 0.0, %v366
      %v368 = vpop.f32.mrb[0].mxu0
      %v369 = vpop.f32.mrb[0].mxu0
      %v370 = vadd.f32 0.0, %v369
      %v371 = vpop.f32.mrb[0].mxu0
      %372 = vmatprep.mubr.bf16.mxu0 0
      %373 = vmatmul.mubr.bf16.gmra.mrb[0].mxu0 %v319
      %v374 = vpop.f32.mrb[0].mxu0
      %v375 = vadd.f32 0.0, %v374
      %v376 = vpop.f32.mrb[0].mxu0
      %v377 = vpop.f32.mrb[0].mxu0
      %v378 = vadd.f32 0.0, %v377
      %v379 = vpop.f32.mrb[0].mxu0
      %380 = vmatprep.mubr.bf16.mxu0 0
      %381 = vmatmul.mubr.bf16.gmra.mrb[0].mxu0 %v322
      %v382 = vpop.f32.mrb[0].mxu0
      %v383 = vadd.f32 0.0, %v382
      %v384 = vpop.f32.mrb[0].mxu0
      %v385 = vpop.f32.mrb[0].mxu0
      %v386 = vadd.f32 0.0, %v385
      %v387 = vpop.f32.mrb[0].mxu0
      %388 = vdwg.mxu0
      %v389 = vmax.f32 %v253, %v359
      %v390 = vmax.f32 %v256, %v362
      %v391 = vmax.f32 %v261, %v367
      %v392 = vmax.f32 %v264, %v370
      %v393 = vmax.f32 %v269, %v375
      %v394 = vmax.f32 %v272, %v378
      %v395 = vmax.f32 %v277, %v383
      %v396 = vmax.f32 %v280, %v386
      %s397 = scalar_lea.vmem %s165, 64
      %v398 = vld [vmem:[%s397] sm:$0xf]
      %v399 = vld [vmem:[%s397 + $0x4] sm:$0xf]
      %v400 = vld [vmem:[%s397 + $0x8] sm:$0xf]
      %v401 = vld [vmem:[%s397 + $0xc] sm:$0xf]
      %v402 = vld [vmem:[%s397 + $0x10] sm:$0xf]
      %v403 = vld [vmem:[%s397 + $0x14] sm:$0xf]
      %v404 = vld [vmem:[%s397 + $0x18] sm:$0xf]
      %v405 = vld [vmem:[%s397 + $0x1c] sm:$0xf]
      %v414 = vunpack.c.l.b16 %v398
      %v415 = vunpack.c.l.b16 %v399
      %v416 = vunpack.c.l.b16 %v400
      %v417 = vunpack.c.l.b16 %v401
      %v418 = vunpack.c.l.b16 %v402
      %v419 = vunpack.c.l.b16 %v403
      %v420 = vunpack.c.l.b16 %v404
      %v421 = vunpack.c.l.b16 %v405
      %v422 = vpack.c.b16 %v415, %v414
      %v423 = vpack.c.b16 %v417, %v416
      %v424 = vpack.c.b16 %v419, %v418
      %v425 = vpack.c.b16 %v421, %v420
      %v427 = vsel %vm201, %v422, 0
      %v430 = vsel %vm201, %v423, 0
      %v433 = vsel %vm201, %v424, 0
      %v436 = vsel %vm201, %v425, 0
      %438 = vmatprep.subr.bf16.mxu0 0
      %439 = vmatpush1.bf16.msra.mxu0 %v216
      %440 = vmatprep.subr.bf16.mxu0 0
      %441 = vmatpush1.bf16.msra.mxu0 0
      %442 = vmatprep.subr.bf16.mxu0 0
      %443 = vmatpush1.bf16.msra.mxu0 0
      %444 = vmatprep.subr.bf16.mxu0 0
      %445 = vmatpush1.bf16.msra.mxu0 0
      %446 = vmatprep.subr.bf16.mxu0 0
      %447 = vmatpush1.bf16.msra.mxu0 0
      %448 = vmatprep.subr.bf16.mxu0 0
      %449 = vmatpush1.bf16.msra.mxu0 0
      %450 = vmatprep.subr.bf16.mxu0 0
      %451 = vmatpush1.bf16.msra.mxu0 0
      %452 = vmatprep.subr.bf16.mxu0 0
      %453 = vmatpush1.bf16.msra.mxu0 0
      %454 = vmatprep.subr.bf16.mxu0 0
      %455 = vmatpush1.bf16.msra.mxu0 0
      %456 = vmatprep.subr.bf16.mxu0 0
      %457 = vmatpush1.bf16.msra.mxu0 0
      %458 = vmatprep.subr.bf16.mxu0 0
      %459 = vmatpush1.bf16.msra.mxu0 0
      %460 = vmatprep.subr.bf16.mxu0 0
      %461 = vmatpush1.bf16.msra.mxu0 0
      %462 = vmatprep.subr.bf16.mxu0 0
      %463 = vmatpush1.bf16.msra.mxu0 0
      %464 = vmatprep.subr.bf16.mxu0 0
      %465 = vmatpush1.bf16.msra.mxu0 0
      %466 = vmatprep.subr.bf16.mxu0 0
      %467 = vmatpush1.bf16.msra.mxu0 0
      %468 = vmatprep.subr.bf16.mxu0 0
      %469 = vmatpush1.bf16.msra.mxu0 0
      %470 = vmatprep.mubr.bf16.mxu0 0
      %471 = vmatmul.mubr.bf16.gmra.mrb[0].mxu0 %v427
      %v472 = vpop.f32.mrb[0].mxu0
      %v473 = vadd.f32 0.0, %v472
      %v474 = vpop.f32.mrb[0].mxu0
      %v475 = vpop.f32.mrb[0].mxu0
      %v476 = vadd.f32 0.0, %v475
      %v477 = vpop.f32.mrb[0].mxu0
      %478 = vmatprep.mubr.bf16.mxu0 0
      %479 = vmatmul.mubr.bf16.gmra.mrb[0].mxu0 %v430
      %v480 = vpop.f32.mrb[0].mxu0
      %v481 = vadd.f32 0.0, %v480
      %v482 = vpop.f32.mrb[0].mxu0
      %v483 = vpop.f32.mrb[0].mxu0
      %v484 = vadd.f32 0.0, %v483
      %v485 = vpop.f32.mrb[0].mxu0
      %486 = vmatprep.mubr.bf16.mxu0 0
      %487 = vmatmul.mubr.bf16.gmra.mrb[0].mxu0 %v433
      %v488 = vpop.f32.mrb[0].mxu0
      %v489 = vadd.f32 0.0, %v488
      %v490 = vpop.f32.mrb[0].mxu0
      %v491 = vpop.f32.mrb[0].mxu0
      %v492 = vadd.f32 0.0, %v491
      %v493 = vpop.f32.mrb[0].mxu0
      %494 = vmatprep.mubr.bf16.mxu0 0
      %495 = vmatmul.mubr.bf16.gmra.mrb[0].mxu0 %v436
      %v496 = vpop.f32.mrb[0].mxu0
      %v497 = vadd.f32 0.0, %v496
      %v498 = vpop.f32.mrb[0].mxu0
      %v499 = vpop.f32.mrb[0].mxu0
      %v500 = vadd.f32 0.0, %v499
      %v501 = vpop.f32.mrb[0].mxu0
      %502 = vdwg.mxu0
      %v503 = vmax.f32 %v389, %v473
      %v504 = vmax.f32 %v390, %v476
      %v505 = vmax.f32 %v391, %v481
      %v506 = vmax.f32 %v392, %v484
      %v507 = vmax.f32 %v393, %v489
      %v508 = vmax.f32 %v394, %v492
      %v509 = vmax.f32 %v395, %v497
      %v510 = vmax.f32 %v396, %v500
      %s511 = scalar_lea.vmem %s165, 96
      %v512 = vld [vmem:[%s511] sm:$0xf]
      %v513 = vld [vmem:[%s511 + $0x4] sm:$0xf]
      %v514 = vld [vmem:[%s511 + $0x8] sm:$0xf]
      %v515 = vld [vmem:[%s511 + $0xc] sm:$0xf]
      %v516 = vld [vmem:[%s511 + $0x10] sm:$0xf]
      %v517 = vld [vmem:[%s511 + $0x14] sm:$0xf]
      %v518 = vld [vmem:[%s511 + $0x18] sm:$0xf]
      %v519 = vld [vmem:[%s511 + $0x1c] sm:$0xf]
      %v528 = vunpack.c.l.b16 %v512
      %v529 = vunpack.c.l.b16 %v513
      %v530 = vunpack.c.l.b16 %v514
      %v531 = vunpack.c.l.b16 %v515
      %v532 = vunpack.c.l.b16 %v516
      %v533 = vunpack.c.l.b16 %v517
      %v534 = vunpack.c.l.b16 %v518
      %v535 = vunpack.c.l.b16 %v519
      %v536 = vpack.c.b16 %v529, %v528
      %v537 = vpack.c.b16 %v531, %v530
      %v538 = vpack.c.b16 %v533, %v532
      %v539 = vpack.c.b16 %v535, %v534
      %v541 = vsel %vm201, %v536, 0
      %v544 = vsel %vm201, %v537, 0
      %v547 = vsel %vm201, %v538, 0
      %v550 = vsel %vm201, %v539, 0
      %552 = vmatprep.subr.bf16.mxu0 0
      %553 = vmatpush1.bf16.msra.mxu0 %v216
      %554 = vmatprep.subr.bf16.mxu0 0
      %555 = vmatpush1.bf16.msra.mxu0 0
      %556 = vmatprep.subr.bf16.mxu0 0
      %557 = vmatpush1.bf16.msra.mxu0 0
      %558 = vmatprep.subr.bf16.mxu0 0
      %559 = vmatpush1.bf16.msra.mxu0 0
      %560 = vmatprep.subr.bf16.mxu0 0
      %561 = vmatpush1.bf16.msra.mxu0 0
      %562 = vmatprep.subr.bf16.mxu0 0
      %563 = vmatpush1.bf16.msra.mxu0 0
      %564 = vmatprep.subr.bf16.mxu0 0
      %565 = vmatpush1.bf16.msra.mxu0 0
      %566 = vmatprep.subr.bf16.mxu0 0
      %567 = vmatpush1.bf16.msra.mxu0 0
      %568 = vmatprep.subr.bf16.mxu0 0
      %569 = vmatpush1.bf16.msra.mxu0 0
      %570 = vmatprep.subr.bf16.mxu0 0
      %571 = vmatpush1.bf16.msra.mxu0 0
      %572 = vmatprep.subr.bf16.mxu0 0
      %573 = vmatpush1.bf16.msra.mxu0 0
      %574 = vmatprep.subr.bf16.mxu0 0
      %575 = vmatpush1.bf16.msra.mxu0 0
      %576 = vmatprep.subr.bf16.mxu0 0
      %577 = vmatpush1.bf16.msra.mxu0 0
      %578 = vmatprep.subr.bf16.mxu0 0
      %579 = vmatpush1.bf16.msra.mxu0 0
      %580 = vmatprep.subr.bf16.mxu0 0
      %581 = vmatpush1.bf16.msra.mxu0 0
      %582 = vmatprep.subr.bf16.mxu0 0
      %583 = vmatpush1.bf16.msra.mxu0 0
      %584 = vmatprep.mubr.bf16.mxu0 0
      %585 = vmatmul.mubr.bf16.gmra.mrb[0].mxu0 %v541
      %v586 = vpop.f32.mrb[0].mxu0
      %v587 = vadd.f32 0.0, %v586
      %v588 = vpop.f32.mrb[0].mxu0
      %v589 = vpop.f32.mrb[0].mxu0
      %v590 = vadd.f32 0.0, %v589
      %v591 = vpop.f32.mrb[0].mxu0
      %592 = vmatprep.mubr.bf16.mxu0 0
      %593 = vmatmul.mubr.bf16.gmra.mrb[0].mxu0 %v544
      %v594 = vpop.f32.mrb[0].mxu0
      %v595 = vadd.f32 0.0, %v594
      %v596 = vpop.f32.mrb[0].mxu0
      %v597 = vpop.f32.mrb[0].mxu0
      %v598 = vadd.f32 0.0, %v597
      %v599 = vpop.f32.mrb[0].mxu0
      %600 = vmatprep.mubr.bf16.mxu0 0
      %601 = vmatmul.mubr.bf16.gmra.mrb[0].mxu0 %v547
      %v602 = vpop.f32.mrb[0].mxu0
      %v603 = vadd.f32 0.0, %v602
      %v604 = vpop.f32.mrb[0].mxu0
      %v605 = vpop.f32.mrb[0].mxu0
      %v606 = vadd.f32 0.0, %v605
      %v607 = vpop.f32.mrb[0].mxu0
      %608 = vmatprep.mubr.bf16.mxu0 0
      %609 = vmatmul.mubr.bf16.gmra.mrb[0].mxu0 %v550
      %v610 = vpop.f32.mrb[0].mxu0
      %v611 = vadd.f32 0.0, %v610
      %v612 = vpop.f32.mrb[0].mxu0
      %v613 = vpop.f32.mrb[0].mxu0
      %v614 = vadd.f32 0.0, %v613
      %v615 = vpop.f32.mrb[0].mxu0
      %616 = vdwg.mxu0
      %v617 = vmax.f32 %v503, %v587
      %v618 = vmax.f32 %v504, %v590
      %v619 = vmax.f32 %v505, %v595
      %v620 = vmax.f32 %v506, %v598
      %v621 = vmax.f32 %v507, %v603
      %v622 = vmax.f32 %v508, %v606
      %v623 = vmax.f32 %v509, %v611
      %v624 = vmax.f32 %v510, %v614
      %v625 = vld [vmem:[%s2] sm:$0x1]
      %v627 = vlaneseq
      %v628 = vshrl.u32 %v627, 7
      %v629 = vsub.s32 0, %v628
      %v630 = vrot.slane %v625, %v629
      %v632 = vadd.f32 %v617, %v630
      %v633 = vadd.f32 %v618, %v630
      %v634 = vadd.f32 %v619, %v630
      %v635 = vadd.f32 %v620, %v630
      %v636 = vadd.f32 %v621, %v630
      %v637 = vadd.f32 %v622, %v630
      %v638 = vadd.f32 %v623, %v630
      %v639 = vadd.f32 %v624, %v630
      %v640 = vpack.c.bf16 %v633, %v632
      %v641 = vpack.c.bf16 %v635, %v634
      %v642 = vpack.c.bf16 %v637, %v636
      %v643 = vpack.c.bf16 %v639, %v638
      %v648 = vunpack.c.l.b16 %v640
      %v649 = vunpack.c.h.b16 %v640
      %v650 = vunpack.c.l.b16 %v641
      %v651 = vunpack.c.h.b16 %v641
      %v652 = vunpack.c.l.b16 %v642
      %v653 = vunpack.c.h.b16 %v642
      %v654 = vunpack.c.l.b16 %v643
      %v655 = vunpack.c.h.b16 %v643
      %v656 = vpack.c.b16 %v648, %v648
      %v657 = vpack.c.b16 %v649, %v649
      %v658 = vpack.c.b16 %v650, %v650
      %v659 = vpack.c.b16 %v651, %v651
      %v660 = vpack.c.b16 %v652, %v652
      %v661 = vpack.c.b16 %v653, %v653
      %v662 = vpack.c.b16 %v654, %v654
      %v663 = vpack.c.b16 %v655, %v655
      %vm672 = vcmask 27648
      %673 = vst.msk [vmem:[%s170] sm:$0xf] %vm672, %v656
      %674 = vst.msk [vmem:[%s170 + $0x4] sm:$0xf] %vm672, %v657
      %675 = vst.msk [vmem:[%s170 + $0x8] sm:$0xf] %vm672, %v658
      %676 = vst.msk [vmem:[%s170 + $0xc] sm:$0xf] %vm672, %v659
      %677 = vst.msk [vmem:[%s170 + $0x10] sm:$0xf] %vm672, %v660
      %678 = vst.msk [vmem:[%s170 + $0x14] sm:$0xf] %vm672, %v661
      %679 = vst.msk [vmem:[%s170 + $0x18] sm:$0xf] %vm672, %v662
      %680 = vst.msk [vmem:[%s170 + $0x1c] sm:$0xf] %vm672, %v663
      %p681 = scmp.lt.s32.totalorder %s14, 1
      %s682 = scalar_select %p681, %s14, 1
      %s683 = smul.addr %s682, 8
      %s684 = smul.addr %s683, 4
      %s685 = scalar_lea.vmem %s3, %s684
      // Predicated region
      $region33: #{nonlocal_block_pallas.2} parent=31 // pred_check
        %p686 = pneg %p100
      $region34: #{nonlocal_block_pallas.2} parent=31 // pred_check_branch
        %688 = sbr.rel (%p686) target = $region36
      $region35: #{nonlocal_block_pallas.2} parent=31 // pred_region
        _
      $region36: #{nonlocal_block_pallas.2} parent=31 // pred_fallthru
        _
    $region32: #{nonlocal_block_pallas.2} parent=5 // pred_fallthru
      _
    %p689 = scmp.le.s32.totalorder 2, %s9
    // Predicated region
    $region37: #{nonlocal_block_pallas.2} parent=5 // pred_check
      %p690 = pneg %p689
    $region38: #{nonlocal_block_pallas.2} parent=5 // pred_check_branch
      %692 = sbr.rel (%p690) target = $region40
    $region39: #{nonlocal_block_pallas.2} parent=5 // pred_region
      %s693 = ssub.s32 %s9, 2
      // Predicated region
      $region41: #{nonlocal_block_pallas.2} parent=39 // pred_check
        %p694 = pneg %p106
      $region42: #{nonlocal_block_pallas.2} parent=39 // pred_check_branch
        %696 = sbr.rel (%p694) target = $region44
      $region43: #{nonlocal_block_pallas.2} parent=39 // pred_region
        %p697 = scmp.lt.s32.totalorder %s15, 1
        %s698 = scalar_select %p697, %s15, 1
        %s699 = smul.addr %s698, 8
        %s700 = smul.addr %s699, 4
        %s701 = scalar_lea.vmem %s3, %s700
      $region44: #{nonlocal_block_pallas.2} parent=39 // pred_fallthru
        _
    $region40: #{nonlocal_block_pallas.2} parent=5 // pred_fallthru
      _
  $region6: #{nonlocal_block_pallas.2} parent=0 // loop_footer
    %s13 = sadd.s32 1, %s9
  $region7: #{nonlocal_block_pallas.2} parent=0 // loop_footer_branch
    %8 = sbr.rel target = $region3
  $region8: #{nonlocal_block_pallas.2} parent=0 // loop_exit
    _

// kernel: nonlocal_block_pallas.3
$region0: #{nonlocal_block_pallas.3}
  #allocation0 [shape = 'u32[]', space=smem, size = 0x4, offset = 0x4, fixed_abs, tag = 'smem constant byte address 0x4 - core index']
  #allocation1 [shape = 'u32[144,128]{1,0:T(1,128)}', space=vmem, size = 0x12000, scoped, tag = 'internal scratch']
  %s0 = inlined_call_operand.vmem [shape: f32[2,256,4], index: 0, kind: input, shape index: {}]
  %s1 = inlined_call_operand.vmem [shape: bf16[2,2,64], index: 1, kind: input, shape index: {}]
  %s2 = inlined_call_operand.vmem [shape: bf16[2,64,2], index: 2, kind: input, shape index: {}]
  %s3 = inlined_call_operand.vmem [shape: bf16[4,2], index: 3, kind: input, shape index: {}]
  %s4 = inlined_call_operand.vmem [shape: f32[1,2], index: 4, kind: input, shape index: {}]
  %s5 = inlined_call_operand.vmem [shape: bf16[2,4], index: 5, kind: input, shape index: {}]
  %s6 = inlined_call_operand.vmem [shape: f32[1,4], index: 6, kind: input, shape index: {}]
  %s7 = inlined_call_operand.vmem [shape: f32[2,256,4], index: 7, kind: output, shape index: {}]
  %s8 = sld [smem:[#allocation0]]
  $region61: #{nonlocal_block_pallas.3} parent=0
    _
  %s10 = ssub.s32 1, %s8
  %s11 = scalar_select 0, %s10, %s8
  loop: start=0, step=1, limit=6
  $region2: #{nonlocal_block_pallas.3} parent=0 // loop_pre_header
    _
  $region3: #{nonlocal_block_pallas.3} parent=0 // loop_header
    %s13 = sphi 0, %s17
    %p14 = scmp.ge.s32.totalorder %s13, 6
    %s20 = sphi 0, %s32
    %s21 = sphi 0, %s28
    %s22 = sphi 0, %s20
    %s23 = sphi 0, %s21
    %s24 = sphi 0, %s22
    %s25 = sphi 0, %s23
    %s37 = sphi 0, %s39
    %s40 = sphi 0, %s37
    %s41 = sphi 0, %s40
    %s57 = sphi 0, %s41
    %s63 = sphi 0, %s65
    %s66 = sphi 0, %s63
    %s67 = sphi 0, %s66
    %s83 = sphi 0, %s67
    %s89 = sphi 0, %s91
    %s92 = sphi 0, %s89
    %s93 = sphi 0, %s92
    %s109 = sphi 0, %s93
    %s113 = sphi 0, %s113
    %s115 = sphi 0, %s113
    %s116 = sphi 0, %s115
    %s130 = sphi 0, %s116
    %s134 = sphi 0, %s134
    %s136 = sphi 0, %s134
    %s137 = sphi 0, %s136
    %s151 = sphi 0, %s137
    %s155 = sphi 0, %s155
    %s157 = sphi 0, %s155
    %s158 = sphi 0, %s157
    %s172 = sphi 0, %s158
    %s176 = sphi 0, %s176
    %s178 = sphi 0, %s176
    %s179 = sphi 0, %s178
    %s193 = sphi 0, %s179
    %s201 = sphi 0, %s203
    %s204 = sphi 0, %s201
    %s205 = sphi 0, %s204
    %s221 = sphi 0, %s205
  $region4: #{nonlocal_block_pallas.3} parent=0 // loop_header_branch
    %16 = sbr.rel (%p14) target = $region8
  $region5: #{nonlocal_block_pallas.3} parent=0 // loop_body
    %s18 = ssub.s32 %s13, 1
    %s19 = ssub.s32 %s13, 2
    %s26 = sadd.s32 1, %s21
    %p27 = scmp.ge.s32.totalorder %s26, 2
    %s28 = scalar_select %p27, 0, %s26
    %s29 = sadd.s32 1, %s20
    %s30 = scalar_select %p27, %s29, %s20
    %p31 = scmp.ge.s32.totalorder %s30, 2
    %s32 = scalar_select %p31, 0, %s30
    %s33 = ssub.s32 %s20, %s32
    %s34 = ssub.s32 %s21, %s28
    %s35 = sor.u32 %s33, %s34
    %p36 = scmp.eq.s32.totalorder %s35, 0
    %s38 = sadd.s32 %s37, 1
    %s39 = scalar_select %p36, %s37, %s38
    %p42 = pneg %p36
    %p43 = scmp.eq.s32.totalorder %s13, 3
    %p44 = por %p42, %p43
    %p45 = scmp.ne.s32.totalorder %s37, %s40
    %p46 = scmp.eq.s32.totalorder %s13, 0
    %p47 = por %p45, %p46
    %p48 = scmp.ne.s32.totalorder %s37, %s40
    %p49 = scmp.eq.s32.totalorder %s18, 3
    %p50 = por %p48, %p49
    %p51 = scmp.ne.s32.totalorder %s40, %s41
    %p52 = scmp.eq.s32.totalorder %s18, 0
    %p53 = por %p51, %p52
    %p54 = scmp.ne.s32.totalorder %s40, %s41
    %p55 = scmp.eq.s32.totalorder %s19, 3
    %p56 = por %p54, %p55
    %p58 = scmp.ne.s32.totalorder %s41, %s57
    %p59 = scmp.eq.s32.totalorder %s19, 0
    %p60 = por %p58, %p59
    %s61 = ssub.s32 %s20, %s32
    %p62 = scmp.eq.s32.totalorder %s61, 0
    %s64 = sadd.s32 %s63, 1
    %s65 = scalar_select %p62, %s63, %s64
    %p68 = pneg %p62
    %p69 = scmp.eq.s32.totalorder %s13, 3
    %p70 = por %p68, %p69
    %p71 = scmp.ne.s32.totalorder %s63, %s66
    %p72 = scmp.eq.s32.totalorder %s13, 0
    %p73 = por %p71, %p72
    %p74 = scmp.ne.s32.totalorder %s63, %s66
    %p75 = scmp.eq.s32.totalorder %s18, 3
    %p76 = por %p74, %p75
    %p77 = scmp.ne.s32.totalorder %s66, %s67
    %p78 = scmp.eq.s32.totalorder %s18, 0
    %p79 = por %p77, %p78
    %p80 = scmp.ne.s32.totalorder %s66, %s67
    %p81 = scmp.eq.s32.totalorder %s19, 3
    %p82 = por %p80, %p81
    %p84 = scmp.ne.s32.totalorder %s67, %s83
    %p85 = scmp.eq.s32.totalorder %s19, 0
    %p86 = por %p84, %p85
    %s87 = ssub.s32 %s20, %s32
    %p88 = scmp.eq.s32.totalorder %s87, 0
    %s90 = sadd.s32 %s89, 1
    %s91 = scalar_select %p88, %s89, %s90
    %p94 = pneg %p88
    %p95 = scmp.eq.s32.totalorder %s13, 3
    %p96 = por %p94, %p95
    %p97 = scmp.ne.s32.totalorder %s89, %s92
    %p98 = scmp.eq.s32.totalorder %s13, 0
    %p99 = por %p97, %p98
    %p100 = scmp.ne.s32.totalorder %s89, %s92
    %p101 = scmp.eq.s32.totalorder %s18, 3
    %p102 = por %p100, %p101
    %p103 = scmp.ne.s32.totalorder %s92, %s93
    %p104 = scmp.eq.s32.totalorder %s18, 0
    %p105 = por %p103, %p104
    %p106 = scmp.ne.s32.totalorder %s92, %s93
    %p107 = scmp.eq.s32.totalorder %s19, 3
    %p108 = por %p106, %p107
    %p110 = scmp.ne.s32.totalorder %s93, %s109
    %p111 = scmp.eq.s32.totalorder %s19, 0
    %p112 = por %p110, %p111
    %s114 = sadd.s32 %s113, 1
    %p117 = scmp.eq.s32.totalorder %s13, 3
    %p118 = scmp.ne.s32.totalorder %s113, %s115
    %p119 = scmp.eq.s32.totalorder %s13, 0
    %p120 = por %p118, %p119
    %p121 = scmp.ne.s32.totalorder %s113, %s115
    %p122 = scmp.eq.s32.totalorder %s18, 3
    %p123 = por %p121, %p122
    %p124 = scmp.ne.s32.totalorder %s115, %s116
    %p125 = scmp.eq.s32.totalorder %s18, 0
    %p126 = por %p124, %p125
    %p127 = scmp.ne.s32.totalorder %s115, %s116
    %p128 = scmp.eq.s32.totalorder %s19, 3
    %p129 = por %p127, %p128
    %p131 = scmp.ne.s32.totalorder %s116, %s130
    %p132 = scmp.eq.s32.totalorder %s19, 0
    %p133 = por %p131, %p132
    %s135 = sadd.s32 %s134, 1
    %p138 = scmp.eq.s32.totalorder %s13, 3
    %p139 = scmp.ne.s32.totalorder %s134, %s136
    %p140 = scmp.eq.s32.totalorder %s13, 0
    %p141 = por %p139, %p140
    %p142 = scmp.ne.s32.totalorder %s134, %s136
    %p143 = scmp.eq.s32.totalorder %s18, 3
    %p144 = por %p142, %p143
    %p145 = scmp.ne.s32.totalorder %s136, %s137
    %p146 = scmp.eq.s32.totalorder %s18, 0
    %p147 = por %p145, %p146
    %p148 = scmp.ne.s32.totalorder %s136, %s137
    %p149 = scmp.eq.s32.totalorder %s19, 3
    %p150 = por %p148, %p149
    %p152 = scmp.ne.s32.totalorder %s137, %s151
    %p153 = scmp.eq.s32.totalorder %s19, 0
    %p154 = por %p152, %p153
    %s156 = sadd.s32 %s155, 1
    %p159 = scmp.eq.s32.totalorder %s13, 3
    %p160 = scmp.ne.s32.totalorder %s155, %s157
    %p161 = scmp.eq.s32.totalorder %s13, 0
    %p162 = por %p160, %p161
    %p163 = scmp.ne.s32.totalorder %s155, %s157
    %p164 = scmp.eq.s32.totalorder %s18, 3
    %p165 = por %p163, %p164
    %p166 = scmp.ne.s32.totalorder %s157, %s158
    %p167 = scmp.eq.s32.totalorder %s18, 0
    %p168 = por %p166, %p167
    %p169 = scmp.ne.s32.totalorder %s157, %s158
    %p170 = scmp.eq.s32.totalorder %s19, 3
    %p171 = por %p169, %p170
    %p173 = scmp.ne.s32.totalorder %s158, %s172
    %p174 = scmp.eq.s32.totalorder %s19, 0
    %p175 = por %p173, %p174
    %s177 = sadd.s32 %s176, 1
    %p180 = scmp.eq.s32.totalorder %s13, 3
    %p181 = scmp.ne.s32.totalorder %s176, %s178
    %p182 = scmp.eq.s32.totalorder %s13, 0
    %p183 = por %p181, %p182
    %p184 = scmp.ne.s32.totalorder %s176, %s178
    %p185 = scmp.eq.s32.totalorder %s18, 3
    %p186 = por %p184, %p185
    %p187 = scmp.ne.s32.totalorder %s178, %s179
    %p188 = scmp.eq.s32.totalorder %s18, 0
    %p189 = por %p187, %p188
    %p190 = scmp.ne.s32.totalorder %s178, %s179
    %p191 = scmp.eq.s32.totalorder %s19, 3
    %p192 = por %p190, %p191
    %p194 = scmp.ne.s32.totalorder %s179, %s193
    %p195 = scmp.eq.s32.totalorder %s19, 0
    %p196 = por %p194, %p195
    %s197 = ssub.s32 %s20, %s32
    %s198 = ssub.s32 %s21, %s28
    %s199 = sor.u32 %s197, %s198
    %p200 = scmp.eq.s32.totalorder %s199, 0
    %s202 = sadd.s32 %s201, 1
    %s203 = scalar_select %p200, %s201, %s202
    %p206 = pneg %p200
    %p207 = scmp.eq.s32.totalorder %s13, 3
    %p208 = por %p206, %p207
    %p209 = scmp.ne.s32.totalorder %s201, %s204
    %p210 = scmp.eq.s32.totalorder %s13, 0
    %p211 = por %p209, %p210
    %p212 = scmp.ne.s32.totalorder %s201, %s204
    %p213 = scmp.eq.s32.totalorder %s18, 3
    %p214 = por %p212, %p213
    %p215 = scmp.ne.s32.totalorder %s204, %s205
    %p216 = scmp.eq.s32.totalorder %s18, 0
    %p217 = por %p215, %p216
    %p218 = scmp.ne.s32.totalorder %s204, %s205
    %p219 = scmp.eq.s32.totalorder %s19, 3
    %p220 = por %p218, %p219
    %p222 = scmp.ne.s32.totalorder %s205, %s221
    %p223 = scmp.eq.s32.totalorder %s19, 0
    %p224 = por %p222, %p223
    %p225 = scmp.le.s32.totalorder 1, %s13
    %p226 = scmp.lt.s32.totalorder %s13, 5
    %p227 = pnand %p225, %p226
    %p228 = pneg %p227
    // Predicated region
    $region9: #{nonlocal_block_pallas.3} parent=5 // pred_check
      _
    $region10: #{nonlocal_block_pallas.3} parent=5 // pred_check_branch
      %230 = sbr.rel (%p227) target = $region12
    $region11: #{nonlocal_block_pallas.3} parent=5 // pred_region
      %s231 = ssub.s32 %s13, 1
      // Predicated region
      $region13: #{nonlocal_block_pallas.3} parent=11 // pred_check
        %p232 = pneg %p126
      $region14: #{nonlocal_block_pallas.3} parent=11 // pred_check_branch
        %234 = sbr.rel (%p232) target = $region16
      $region15: #{nonlocal_block_pallas.3} parent=11 // pred_region
        _
      $region16: #{nonlocal_block_pallas.3} parent=11 // pred_fallthru
        _
      // Predicated region
      $region17: #{nonlocal_block_pallas.3} parent=11 // pred_check
        %p235 = pneg %p147
      $region18: #{nonlocal_block_pallas.3} parent=11 // pred_check_branch
        %237 = sbr.rel (%p235) target = $region20
      $region19: #{nonlocal_block_pallas.3} parent=11 // pred_region
        _
      $region20: #{nonlocal_block_pallas.3} parent=11 // pred_fallthru
        _
      // Predicated region
      $region21: #{nonlocal_block_pallas.3} parent=11 // pred_check
        %p238 = pneg %p168
      $region22: #{nonlocal_block_pallas.3} parent=11 // pred_check_branch
        %240 = sbr.rel (%p238) target = $region24
      $region23: #{nonlocal_block_pallas.3} parent=11 // pred_region
        _
      $region24: #{nonlocal_block_pallas.3} parent=11 // pred_fallthru
        _
      // Predicated region
      $region25: #{nonlocal_block_pallas.3} parent=11 // pred_check
        %p241 = pneg %p189
      $region26: #{nonlocal_block_pallas.3} parent=11 // pred_check_branch
        %243 = sbr.rel (%p241) target = $region28
      $region27: #{nonlocal_block_pallas.3} parent=11 // pred_region
        _
      $region28: #{nonlocal_block_pallas.3} parent=11 // pred_fallthru
        _
    $region12: #{nonlocal_block_pallas.3} parent=5 // pred_fallthru
      _
    %p244 = scmp.lt.s32.totalorder %s13, 4
    // Predicated region
    $region29: #{nonlocal_block_pallas.3} parent=5 // pred_check
      %p245 = pneg %p244
    $region30: #{nonlocal_block_pallas.3} parent=5 // pred_check_branch
      %247 = sbr.rel (%p245) target = $region32
    $region31: #{nonlocal_block_pallas.3} parent=5 // pred_region
      // Predicated region
      $region33: #{nonlocal_block_pallas.3} parent=31 // pred_check
        %p248 = pneg %p47
      $region34: #{nonlocal_block_pallas.3} parent=31 // pred_check_branch
        %250 = sbr.rel (%p248) target = $region36
      $region35: #{nonlocal_block_pallas.3} parent=31 // pred_region
        %s251 = smul.u32 16, %s21
        %p252 = scmp.lt.s32.totalorder %s20, 1
        %s253 = scalar_select %p252, %s20, 1
        %p254 = scmp.lt.s32.totalorder %s251, 31
        %s255 = scalar_select %p254, %s251, 31
        %s256 = smul.addr %s253, 32
        %s257 = sadd.s32 %s255, %s256
        %s258 = smul.addr %s257, 8
        %s259 = scalar_lea.vmem %s0, %s258
        %s260 = smul.u32 16, %s21
      $region36: #{nonlocal_block_pallas.3} parent=31 // pred_fallthru
        _
      // Predicated region
      $region37: #{nonlocal_block_pallas.3} parent=31 // pred_check
        %p261 = pneg %p73
      $region38: #{nonlocal_block_pallas.3} parent=31 // pred_check_branch
        %263 = sbr.rel (%p261) target = $region40
      $region39: #{nonlocal_block_pallas.3} parent=31 // pred_region
        %p264 = scmp.lt.s32.totalorder %s20, 1
        %s265 = scalar_select %p264, %s20, 1
        %s266 = scalar_lea.vmem %s1, %s265
      $region40: #{nonlocal_block_pallas.3} parent=31 // pred_fallthru
        _
      // Predicated region
      $region41: #{nonlocal_block_pallas.3} parent=31 // pred_check
        %p267 = pneg %p99
      $region42: #{nonlocal_block_pallas.3} parent=31 // pred_check_branch
        %269 = sbr.rel (%p267) target = $region44
      $region43: #{nonlocal_block_pallas.3} parent=31 // pred_region
        %p270 = scmp.lt.s32.totalorder %s20, 1
        %s271 = scalar_select %p270, %s20, 1
        %s272 = smul.addr %s271, 8
        %s273 = smul.addr %s272, 4
        %s274 = scalar_lea.vmem %s2, %s273
      $region44: #{nonlocal_block_pallas.3} parent=31 // pred_fallthru
        _
    $region32: #{nonlocal_block_pallas.3} parent=5 // pred_fallthru
      _
    %p275 = scmp.le.s32.totalorder 1, %s13
    %p276 = scmp.lt.s32.totalorder %s13, 5
    %p277 = pnand %p275, %p276
    %p278 = pneg %p277
    // Predicated region
    $region45: #{nonlocal_block_pallas.3} parent=5 // pred_check
      _
    $region46: #{nonlocal_block_pallas.3} parent=5 // pred_check_branch
      %280 = sbr.rel (%p277) target = $region48
    $region47: #{nonlocal_block_pallas.3} parent=5 // pred_region
      %s281 = ssub.s32 %s13, 1
      %s282 = smul.u32 16, %s23
      %p283 = scmp.lt.s32.totalorder %s22, 1
      %s284 = scalar_select %p283, %s22, 1
      %p285 = scmp.lt.s32.totalorder %s282, 31
      %s286 = scalar_select %p285, %s282, 31
      %s287 = smul.addr %s284, 32
      %s288 = sadd.s32 %s286, %s287
      %s289 = smul.addr %s288, 8
      %s290 = scalar_lea.vmem %s0, %s289
      %p291 = pneg %p53
      %p292 = pneg %p50
      %p293 = scmp.lt.s32.totalorder %s22, 1
      %s294 = scalar_select %p293, %s22, 1
      %s295 = scalar_lea.vmem %s1, %s294
      %p296 = pneg %p79
      %p297 = pneg %p76
      %p298 = scmp.lt.s32.totalorder %s22, 1
      %s299 = scalar_select %p298, %s22, 1
      %s300 = smul.addr %s299, 8
      %s301 = smul.addr %s300, 4
      %s302 = scalar_lea.vmem %s2, %s301
      %p303 = pneg %p105
      %p304 = pneg %p102
      %p305 = pneg %p126
      %p306 = pneg %p123
      %p307 = pneg %p147
      %p308 = pneg %p144
      %p309 = pneg %p168
      %p310 = pneg %p165
      %p311 = pneg %p189
      %p312 = pneg %p186
      %p313 = pneg %p217
      %p314 = pneg %p214
      %s315 = smul.u32 16, %s23
      %p316 = scmp.lt.s32.totalorder %s22, 1
      %s317 = scalar_select %p316, %s22, 1
      %p318 = scmp.lt.s32.totalorder %s315, 31
      %s319 = scalar_select %p318, %s315, 31
      %s320 = smul.addr %s317, 32
      %s321 = sadd.s32 %s319, %s320
      %s322 = smul.addr %s321, 8
      %s323 = scalar_lea.vmem %s7, %s322
      %s324 = smul.u32 16, %s23
      %p325 = scmp.lt.s32.totalorder %s22, 1
      %s326 = scalar_select %p325, %s22, 1
      %p327 = scmp.lt.s32.totalorder %s324, 31
      %s328 = scalar_select %p327, %s324, 31
      %s329 = smul.addr %s326, 32
      %s330 = sadd.s32 %s328, %s329
      %s331 = smul.addr %s330, 8
      %s332 = scalar_lea.vmem %s0, %s331
      %s333 = smul.u32 16, %s23
      %p334 = scmp.lt.s32.totalorder %s22, 1
      %s335 = scalar_select %p334, %s22, 1
      %s336 = scalar_lea.vmem %s1, %s335
      %p337 = scmp.lt.s32.totalorder %s22, 1
      %s338 = scalar_select %p337, %s22, 1
      %s339 = smul.addr %s338, 8
      %s340 = smul.addr %s339, 4
      %s341 = scalar_lea.vmem %s2, %s340
      %s342 = smul.u32 16, %s23
      %p343 = scmp.lt.s32.totalorder %s22, 1
      %s344 = scalar_select %p343, %s22, 1
      %p345 = scmp.lt.s32.totalorder %s342, 31
      %s346 = scalar_select %p345, %s342, 31
      %s347 = smul.addr %s344, 32
      %s348 = sadd.s32 %s346, %s347
      %s349 = smul.addr %s348, 8
      %s350 = scalar_lea.vmem %s7, %s349
      %s351 = smul.u32 16, %s23
      %v353 = vld [vmem:[%s332] sm:$0xff]
      %v354 = vld [vmem:[%s332 + $0x8] sm:$0xff]
      %v355 = vld [vmem:[%s332 + $0x10] sm:$0xff]
      %v356 = vld [vmem:[%s332 + $0x18] sm:$0xff]
      %v357 = vld [vmem:[%s332 + $0x20] sm:$0xff]
      %v358 = vld [vmem:[%s332 + $0x28] sm:$0xff]
      %v359 = vld [vmem:[%s332 + $0x30] sm:$0xff]
      %v360 = vld [vmem:[%s332 + $0x38] sm:$0xff]
      %v361 = vld [vmem:[%s332 + $0x40] sm:$0xff]
      %v362 = vld [vmem:[%s332 + $0x48] sm:$0xff]
      %v363 = vld [vmem:[%s332 + $0x50] sm:$0xff]
      %v364 = vld [vmem:[%s332 + $0x58] sm:$0xff]
      %v365 = vld [vmem:[%s332 + $0x60] sm:$0xff]
      %v366 = vld [vmem:[%s332 + $0x68] sm:$0xff]
      %v367 = vld [vmem:[%s332 + $0x70] sm:$0xff]
      %v368 = vld [vmem:[%s332 + $0x78] sm:$0xff]
      %v369 = vpack.c.bf16 %v354, %v353
      %v370 = vpack.c.bf16 %v356, %v355
      %v371 = vpack.c.bf16 %v358, %v357
      %v372 = vpack.c.bf16 %v360, %v359
      %v373 = vpack.c.bf16 %v362, %v361
      %v374 = vpack.c.bf16 %v364, %v363
      %v375 = vpack.c.bf16 %v366, %v365
      %v376 = vpack.c.bf16 %v368, %v367
      %v377 = vld [vmem:[%s3] sm:$0x3]
      %v378 = vld [vmem:[%s4] sm:$0x1]
      %v380 = vlaneseq
      %v381 = vshrl.u32 %v380, 7
      %v382 = vsub.s32 0, %v381
      %v383 = vrot.slane %v378, %v382
      %vm385 = vcmask 31744
      %v387 = vsel %vm385, %v369, 0
      %v390 = vsel %vm385, %v370, 0
      %v393 = vsel %vm385, %v371, 0
      %v396 = vsel %vm385, %v372, 0
      %v399 = vsel %vm385, %v373, 0
      %v402 = vsel %vm385, %v374, 0
      %v405 = vsel %vm385, %v375, 0
      %v408 = vsel %vm385, %v376, 0
      %vm410 = vcmask 1041408
      %v412 = vsel %vm410, %v377, 0
      %414 = vmatprep.subr.bf16.mxu0 0
      %415 = vmatpush1.bf16.msra.mxu0 %v412
      %416 = vmatprep.subr.bf16.mxu0 0
      %417 = vmatpush1.bf16.msra.mxu0 0
      %418 = vmatprep.subr.bf16.mxu0 0
      %419 = vmatpush1.bf16.msra.mxu0 0
      %420 = vmatprep.subr.bf16.mxu0 0
      %421 = vmatpush1.bf16.msra.mxu0 0
      %422 = vmatprep.subr.bf16.mxu0 0
      %423 = vmatpush1.bf16.msra.mxu0 0
      %424 = vmatprep.subr.bf16.mxu0 0
      %425 = vmatpush1.bf16.msra.mxu0 0
      %426 = vmatprep.subr.bf16.mxu0 0
      %427 = vmatpush1.bf16.msra.mxu0 0
      %428 = vmatprep.subr.bf16.mxu0 0
      %429 = vmatpush1.bf16.msra.mxu0 0
      %430 = vmatprep.subr.bf16.mxu0 0
      %431 = vmatpush1.bf16.msra.mxu0 0
      %432 = vmatprep.subr.bf16.mxu0 0
      %433 = vmatpush1.bf16.msra.mxu0 0
      %434 = vmatprep.subr.bf16.mxu0 0
      %435 = vmatpush1.bf16.msra.mxu0 0
      %436 = vmatprep.subr.bf16.mxu0 0
      %437 = vmatpush1.bf16.msra.mxu0 0
      %438 = vmatprep.subr.bf16.mxu0 0
      %439 = vmatpush1.bf16.msra.mxu0 0
      %440 = vmatprep.subr.bf16.mxu0 0
      %441 = vmatpush1.bf16.msra.mxu0 0
      %442 = vmatprep.subr.bf16.mxu0 0
      %443 = vmatpush1.bf16.msra.mxu0 0
      %444 = vmatprep.subr.bf16.mxu0 0
      %445 = vmatpush1.bf16.msra.mxu0 0
      %446 = vmatprep.mubr.bf16.mxu0 0
      %447 = vmatmul.mubr.bf16.gmra.mrb[0].mxu0 %v387
      %v448 = vpop.f32.mrb[0].mxu0
      %v449 = vadd.f32 %v383, %v448
      %v450 = vpop.f32.mrb[0].mxu0
      %v451 = vpop.f32.mrb[0].mxu0
      %v452 = vadd.f32 %v383, %v451
      %v453 = vpop.f32.mrb[0].mxu0
      %454 = vmatprep.mubr.bf16.mxu0 0
      %455 = vmatmul.mubr.bf16.gmra.mrb[0].mxu0 %v390
      %v456 = vpop.f32.mrb[0].mxu0
      %v457 = vadd.f32 %v383, %v456
      %v458 = vpop.f32.mrb[0].mxu0
      %v459 = vpop.f32.mrb[0].mxu0
      %v460 = vadd.f32 %v383, %v459
      %v461 = vpop.f32.mrb[0].mxu0
      %462 = vmatprep.mubr.bf16.mxu0 0
      %463 = vmatmul.mubr.bf16.gmra.mrb[0].mxu0 %v393
      %v464 = vpop.f32.mrb[0].mxu0
      %v465 = vadd.f32 %v383, %v464
      %v466 = vpop.f32.mrb[0].mxu0
      %v467 = vpop.f32.mrb[0].mxu0
      %v468 = vadd.f32 %v383, %v467
      %v469 = vpop.f32.mrb[0].mxu0
      %470 = vmatprep.mubr.bf16.mxu0 0
      %471 = vmatmul.mubr.bf16.gmra.mrb[0].mxu0 %v396
      %v472 = vpop.f32.mrb[0].mxu0
      %v473 = vadd.f32 %v383, %v472
      %v474 = vpop.f32.mrb[0].mxu0
      %v475 = vpop.f32.mrb[0].mxu0
      %v476 = vadd.f32 %v383, %v475
      %v477 = vpop.f32.mrb[0].mxu0
      %478 = vmatprep.mubr.bf16.mxu0 0
      %479 = vmatmul.mubr.bf16.gmra.mrb[0].mxu0 %v399
      %v480 = vpop.f32.mrb[0].mxu0
      %v481 = vadd.f32 %v383, %v480
      %v482 = vpop.f32.mrb[0].mxu0
      %v483 = vpop.f32.mrb[0].mxu0
      %v484 = vadd.f32 %v383, %v483
      %v485 = vpop.f32.mrb[0].mxu0
      %486 = vmatprep.mubr.bf16.mxu0 0
      %487 = vmatmul.mubr.bf16.gmra.mrb[0].mxu0 %v402
      %v488 = vpop.f32.mrb[0].mxu0
      %v489 = vadd.f32 %v383, %v488
      %v490 = vpop.f32.mrb[0].mxu0
      %v491 = vpop.f32.mrb[0].mxu0
      %v492 = vadd.f32 %v383, %v491
      %v493 = vpop.f32.mrb[0].mxu0
      %494 = vmatprep.mubr.bf16.mxu0 0
      %495 = vmatmul.mubr.bf16.gmra.mrb[0].mxu0 %v405
      %v496 = vpop.f32.mrb[0].mxu0
      %v497 = vadd.f32 %v383, %v496
      %v498 = vpop.f32.mrb[0].mxu0
      %v499 = vpop.f32.mrb[0].mxu0
      %v500 = vadd.f32 %v383, %v499
      %v501 = vpop.f32.mrb[0].mxu0
      %502 = vmatprep.mubr.bf16.mxu0 0
      %503 = vmatmul.mubr.bf16.gmra.mrb[0].mxu0 %v408
      %v504 = vpop.f32.mrb[0].mxu0
      %v505 = vadd.f32 %v383, %v504
      %v506 = vpop.f32.mrb[0].mxu0
      %v507 = vpop.f32.mrb[0].mxu0
      %v508 = vadd.f32 %v383, %v507
      %v509 = vpop.f32.mrb[0].mxu0
      %510 = vdwg.mxu0
      %v511 = vpack.c.bf16 %v452, %v449
      %v512 = vpack.c.bf16 %v460, %v457
      %v513 = vpack.c.bf16 %v468, %v465
      %v514 = vpack.c.bf16 %v476, %v473
      %v515 = vpack.c.bf16 %v484, %v481
      %v516 = vpack.c.bf16 %v492, %v489
      %v517 = vpack.c.bf16 %v500, %v497
      %v518 = vpack.c.bf16 %v508, %v505
      %v519 = vld [vmem:[%s336] sm:$0x1]
      %vm520 = vcmask 15360
      %v522 = vsel %vm520, %v511, 0
      %v525 = vsel %vm520, %v512, 0
      %v528 = vsel %vm520, %v513, 0
      %v531 = vsel %vm520, %v514, 0
      %v534 = vsel %vm520, %v515, 0
      %v537 = vsel %vm520, %v516, 0
      %v540 = vsel %vm520, %v517, 0
      %v543 = vsel %vm520, %v518, 0
      %vm545 = vcmask 1040384
      %v547 = vsel %vm545, %v519, 0
      %549 = vmatprep.subr.bf16.mxu0 0
      %550 = vmatpush1.bf16.msra.mxu0 %v547
      %551 = vmatprep.subr.bf16.mxu0 0
      %552 = vmatpush1.bf16.msra.mxu0 0
      %553 = vmatprep.subr.bf16.mxu0 0
      %554 = vmatpush1.bf16.msra.mxu0 0
      %555 = vmatprep.subr.bf16.mxu0 0
      %556 = vmatpush1.bf16.msra.mxu0 0
      %557 = vmatprep.subr.bf16.mxu0 0
      %558 = vmatpush1.bf16.msra.mxu0 0
      %559 = vmatprep.subr.bf16.mxu0 0
      %560 = vmatpush1.bf16.msra.mxu0 0
      %561 = vmatprep.subr.bf16.mxu0 0
      %562 = vmatpush1.bf16.msra.mxu0 0
      %563 = vmatprep.subr.bf16.mxu0 0
      %564 = vmatpush1.bf16.msra.mxu0 0
      %565 = vmatprep.subr.bf16.mxu0 0
      %566 = vmatpush1.bf16.msra.mxu0 0
      %567 = vmatprep.subr.bf16.mxu0 0
      %568 = vmatpush1.bf16.msra.mxu0 0
      %569 = vmatprep.subr.bf16.mxu0 0
      %570 = vmatpush1.bf16.msra.mxu0 0
      %571 = vmatprep.subr.bf16.mxu0 0
      %572 = vmatpush1.bf16.msra.mxu0 0
      %573 = vmatprep.subr.bf16.mxu0 0
      %574 = vmatpush1.bf16.msra.mxu0 0
      %575 = vmatprep.subr.bf16.mxu0 0
      %576 = vmatpush1.bf16.msra.mxu0 0
      %577 = vmatprep.subr.bf16.mxu0 0
      %578 = vmatpush1.bf16.msra.mxu0 0
      %579 = vmatprep.subr.bf16.mxu0 0
      %580 = vmatpush1.bf16.msra.mxu0 0
      %581 = vmatprep.mubr.bf16.mxu0 0
      %582 = vmatmul.mubr.bf16.gmra.mrb[0].mxu0 %v522
      %v583 = vpop.f32.mrb[0].mxu0
      %v584 = vadd.f32 0.0, %v583
      %v585 = vpop.f32.mrb[0].mxu0
      %v586 = vpop.f32.mrb[0].mxu0
      %v587 = vadd.f32 0.0, %v586
      %v588 = vpop.f32.mrb[0].mxu0
      %589 = vmatprep.mubr.bf16.mxu0 0
      %590 = vmatmul.mubr.bf16.gmra.mrb[0].mxu0 %v525
      %v591 = vpop.f32.mrb[0].mxu0
      %v592 = vadd.f32 0.0, %v591
      %v593 = vpop.f32.mrb[0].mxu0
      %v594 = vpop.f32.mrb[0].mxu0
      %v595 = vadd.f32 0.0, %v594
      %v596 = vpop.f32.mrb[0].mxu0
      %597 = vmatprep.mubr.bf16.mxu0 0
      %598 = vmatmul.mubr.bf16.gmra.mrb[0].mxu0 %v528
      %v599 = vpop.f32.mrb[0].mxu0
      %v600 = vadd.f32 0.0, %v599
      %v601 = vpop.f32.mrb[0].mxu0
      %v602 = vpop.f32.mrb[0].mxu0
      %v603 = vadd.f32 0.0, %v602
      %v604 = vpop.f32.mrb[0].mxu0
      %605 = vmatprep.mubr.bf16.mxu0 0
      %606 = vmatmul.mubr.bf16.gmra.mrb[0].mxu0 %v531
      %v607 = vpop.f32.mrb[0].mxu0
      %v608 = vadd.f32 0.0, %v607
      %v609 = vpop.f32.mrb[0].mxu0
      %v610 = vpop.f32.mrb[0].mxu0
      %v611 = vadd.f32 0.0, %v610
      %v612 = vpop.f32.mrb[0].mxu0
      %613 = vmatprep.mubr.bf16.mxu0 0
      %614 = vmatmul.mubr.bf16.gmra.mrb[0].mxu0 %v534
      %v615 = vpop.f32.mrb[0].mxu0
      %v616 = vadd.f32 0.0, %v615
      %v617 = vpop.f32.mrb[0].mxu0
      %v618 = vpop.f32.mrb[0].mxu0
      %v619 = vadd.f32 0.0, %v618
      %v620 = vpop.f32.mrb[0].mxu0
      %621 = vmatprep.mubr.bf16.mxu0 0
      %622 = vmatmul.mubr.bf16.gmra.mrb[0].mxu0 %v537
      %v623 = vpop.f32.mrb[0].mxu0
      %v624 = vadd.f32 0.0, %v623
      %v625 = vpop.f32.mrb[0].mxu0
      %v626 = vpop.f32.mrb[0].mxu0
      %v627 = vadd.f32 0.0, %v626
      %v628 = vpop.f32.mrb[0].mxu0
      %629 = vmatprep.mubr.bf16.mxu0 0
      %630 = vmatmul.mubr.bf16.gmra.mrb[0].mxu0 %v540
      %v631 = vpop.f32.mrb[0].mxu0
      %v632 = vadd.f32 0.0, %v631
      %v633 = vpop.f32.mrb[0].mxu0
      %v634 = vpop.f32.mrb[0].mxu0
      %v635 = vadd.f32 0.0, %v634
      %v636 = vpop.f32.mrb[0].mxu0
      %637 = vmatprep.mubr.bf16.mxu0 0
      %638 = vmatmul.mubr.bf16.gmra.mrb[0].mxu0 %v543
      %v639 = vpop.f32.mrb[0].mxu0
      %v640 = vadd.f32 0.0, %v639
      %v641 = vpop.f32.mrb[0].mxu0
      %v642 = vpop.f32.mrb[0].mxu0
      %v643 = vadd.f32 0.0, %v642
      %v644 = vpop.f32.mrb[0].mxu0
      %645 = vdwg.mxu0
      %v646 = vpack.c.bf16 %v587, %v584
      %v647 = vpack.c.bf16 %v595, %v592
      %v648 = vpack.c.bf16 %v603, %v600
      %v649 = vpack.c.bf16 %v611, %v608
      %v650 = vpack.c.bf16 %v619, %v616
      %v651 = vpack.c.bf16 %v627, %v624
      %v652 = vpack.c.bf16 %v635, %v632
      %v653 = vpack.c.bf16 %v643, %v640
      %v654 = vld [vmem:[%s341] sm:$0xf]
      %v655 = vld [vmem:[%s341 + $0x4] sm:$0xf]
      %v656 = vld [vmem:[%s341 + $0x8] sm:$0xf]
      %v657 = vld [vmem:[%s341 + $0xc] sm:$0xf]
      %v658 = vld [vmem:[%s341 + $0x10] sm:$0xf]
      %v659 = vld [vmem:[%s341 + $0x14] sm:$0xf]
      %v660 = vld [vmem:[%s341 + $0x18] sm:$0xf]
      %v661 = vld [vmem:[%s341 + $0x1c] sm:$0xf]
      %v670 = vunpack.c.l.b16 %v654
      %v671 = vunpack.c.l.b16 %v655
      %v672 = vunpack.c.l.b16 %v656
      %v673 = vunpack.c.l.b16 %v657
      %v674 = vunpack.c.l.b16 %v658
      %v675 = vunpack.c.l.b16 %v659
      %v676 = vunpack.c.l.b16 %v660
      %v677 = vunpack.c.l.b16 %v661
      %v678 = vpack.c.b16 %v671, %v670
      %v679 = vpack.c.b16 %v673, %v672
      %v680 = vpack.c.b16 %v675, %v674
      %v681 = vpack.c.b16 %v677, %v676
      %vm686 = vcmask 523264
      %v688 = vsel %vm686, %v646, 0
      %v691 = vsel %vm686, %v647, 0
      %v694 = vsel %vm686, %v648, 0
      %v697 = vsel %vm686, %v649, 0
      %v700 = vsel %vm686, %v650, 0
      %v703 = vsel %vm686, %v651, 0
      %v706 = vsel %vm686, %v652, 0
      %v709 = vsel %vm686, %v653, 0
      %711 = vmatprep.subr.bf16.mxu0 0
      %712 = vmatpush1.bf16.msra.mxu0 %v678
      %713 = vmatprep.subr.bf16.mxu0 0
      %714 = vmatpush1.bf16.msra.mxu0 %v679
      %715 = vmatprep.subr.bf16.mxu0 0
      %716 = vmatpush1.bf16.msra.mxu0 %v680
      %717 = vmatprep.subr.bf16.mxu0 0
      %718 = vmatpush1.bf16.msra.mxu0 %v681
      %719 = vmatprep.subr.bf16.mxu0 0
      %720 = vmatpush1.bf16.msra.mxu0 0
      %721 = vmatprep.subr.bf16.mxu0 0
      %722 = vmatpush1.bf16.msra.mxu0 0
      %723 = vmatprep.subr.bf16.mxu0 0
      %724 = vmatpush1.bf16.msra.mxu0 0
      %725 = vmatprep.subr.bf16.mxu0 0
      %726 = vmatpush1.bf16.msra.mxu0 0
      %727 = vmatprep.subr.bf16.mxu0 0
      %728 = vmatpush1.bf16.msra.mxu0 0
      %729 = vmatprep.subr.bf16.mxu0 0
      %730 = vmatpush1.bf16.msra.mxu0 0
      %731 = vmatprep.subr.bf16.mxu0 0
      %732 = vmatpush1.bf16.msra.mxu0 0
      %733 = vmatprep.subr.bf16.mxu0 0
      %734 = vmatpush1.bf16.msra.mxu0 0
      %735 = vmatprep.subr.bf16.mxu0 0
      %736 = vmatpush1.bf16.msra.mxu0 0
      %737 = vmatprep.subr.bf16.mxu0 0
      %738 = vmatpush1.bf16.msra.mxu0 0
      %739 = vmatprep.subr.bf16.mxu0 0
      %740 = vmatpush1.bf16.msra.mxu0 0
      %741 = vmatprep.subr.bf16.mxu0 0
      %742 = vmatpush1.bf16.msra.mxu0 0
      %743 = vmatprep.mubr.bf16.mxu0 0
      %744 = vmatmul.mubr.bf16.gmra.mrb[0].mxu0 %v688
      %v745 = vpop.f32.mrb[0].mxu0
      %v746 = vadd.f32 0.0, %v745
      %v747 = vpop.f32.mrb[0].mxu0
      %v748 = vpop.f32.mrb[0].mxu0
      %v749 = vadd.f32 0.0, %v748
      %v750 = vpop.f32.mrb[0].mxu0
      %751 = vmatprep.mubr.bf16.mxu0 0
      %752 = vmatmul.mubr.bf16.gmra.mrb[0].mxu0 %v691
      %v753 = vpop.f32.mrb[0].mxu0
      %v754 = vadd.f32 0.0, %v753
      %v755 = vpop.f32.mrb[0].mxu0
      %v756 = vpop.f32.mrb[0].mxu0
      %v757 = vadd.f32 0.0, %v756
      %v758 = vpop.f32.mrb[0].mxu0
      %759 = vmatprep.mubr.bf16.mxu0 0
      %760 = vmatmul.mubr.bf16.gmra.mrb[0].mxu0 %v694
      %v761 = vpop.f32.mrb[0].mxu0
      %v762 = vadd.f32 0.0, %v761
      %v763 = vpop.f32.mrb[0].mxu0
      %v764 = vpop.f32.mrb[0].mxu0
      %v765 = vadd.f32 0.0, %v764
      %v766 = vpop.f32.mrb[0].mxu0
      %767 = vmatprep.mubr.bf16.mxu0 0
      %768 = vmatmul.mubr.bf16.gmra.mrb[0].mxu0 %v697
      %v769 = vpop.f32.mrb[0].mxu0
      %v770 = vadd.f32 0.0, %v769
      %v771 = vpop.f32.mrb[0].mxu0
      %v772 = vpop.f32.mrb[0].mxu0
      %v773 = vadd.f32 0.0, %v772
      %v774 = vpop.f32.mrb[0].mxu0
      %775 = vmatprep.mubr.bf16.mxu0 0
      %776 = vmatmul.mubr.bf16.gmra.mrb[0].mxu0 %v700
      %v777 = vpop.f32.mrb[0].mxu0
      %v778 = vadd.f32 0.0, %v777
      %v779 = vpop.f32.mrb[0].mxu0
      %v780 = vpop.f32.mrb[0].mxu0
      %v781 = vadd.f32 0.0, %v780
      %v782 = vpop.f32.mrb[0].mxu0
      %783 = vmatprep.mubr.bf16.mxu0 0
      %784 = vmatmul.mubr.bf16.gmra.mrb[0].mxu0 %v703
      %v785 = vpop.f32.mrb[0].mxu0
      %v786 = vadd.f32 0.0, %v785
      %v787 = vpop.f32.mrb[0].mxu0
      %v788 = vpop.f32.mrb[0].mxu0
      %v789 = vadd.f32 0.0, %v788
      %v790 = vpop.f32.mrb[0].mxu0
      %791 = vmatprep.mubr.bf16.mxu0 0
      %792 = vmatmul.mubr.bf16.gmra.mrb[0].mxu0 %v706
      %v793 = vpop.f32.mrb[0].mxu0
      %v794 = vadd.f32 0.0, %v793
      %v795 = vpop.f32.mrb[0].mxu0
      %v796 = vpop.f32.mrb[0].mxu0
      %v797 = vadd.f32 0.0, %v796
      %v798 = vpop.f32.mrb[0].mxu0
      %799 = vmatprep.mubr.bf16.mxu0 0
      %800 = vmatmul.mubr.bf16.gmra.mrb[0].mxu0 %v709
      %v801 = vpop.f32.mrb[0].mxu0
      %v802 = vadd.f32 0.0, %v801
      %v803 = vpop.f32.mrb[0].mxu0
      %v804 = vpop.f32.mrb[0].mxu0
      %v805 = vadd.f32 0.0, %v804
      %v806 = vpop.f32.mrb[0].mxu0
      %807 = vdwg.mxu0
      %v808 = vpack.c.bf16 %v749, %v746
      %v809 = vpack.c.bf16 %v757, %v754
      %v810 = vpack.c.bf16 %v765, %v762
      %v811 = vpack.c.bf16 %v773, %v770
      %v812 = vpack.c.bf16 %v781, %v778
      %v813 = vpack.c.bf16 %v789, %v786
      %v814 = vpack.c.bf16 %v797, %v794
      %v815 = vpack.c.bf16 %v805, %v802
      %v816 = vld [vmem:[%s5] sm:$0x1]
      %v817 = vld [vmem:[%s6] sm:$0x1]
      %v819 = vlaneseq
      %v820 = vshrl.u32 %v819, 7
      %v821 = vsub.s32 0, %v820
      %v822 = vrot.slane %v817, %v821
      %v825 = vsel %vm520, %v808, 0
      %v828 = vsel %vm520, %v809, 0
      %v831 = vsel %vm520, %v810, 0
      %v834 = vsel %vm520, %v811, 0
      %v837 = vsel %vm520, %v812, 0
      %v840 = vsel %vm520, %v813, 0
      %v843 = vsel %vm520, %v814, 0
      %v846 = vsel %vm520, %v815, 0
      %v849 = vsel %vm545, %v816, 0
      %851 = vmatprep.subr.bf16.mxu0 0
      %852 = vmatpush1.bf16.msra.mxu0 %v849
      %853 = vmatprep.subr.bf16.mxu0 0
      %854 = vmatpush1.bf16.msra.mxu0 0
      %855 = vmatprep.subr.bf16.mxu0 0
      %856 = vmatpush1.bf16.msra.mxu0 0
      %857 = vmatprep.subr.bf16.mxu0 0
      %858 = vmatpush1.bf16.msra.mxu0 0
      %859 = vmatprep.subr.bf16.mxu0 0
      %860 = vmatpush1.bf16.msra.mxu0 0
      %861 = vmatprep.subr.bf16.mxu0 0
      %862 = vmatpush1.bf16.msra.mxu0 0
      %863 = vmatprep.subr.bf16.mxu0 0
      %864 = vmatpush1.bf16.msra.mxu0 0
      %865 = vmatprep.subr.bf16.mxu0 0
      %866 = vmatpush1.bf16.msra.mxu0 0
      %867 = vmatprep.subr.bf16.mxu0 0
      %868 = vmatpush1.bf16.msra.mxu0 0
      %869 = vmatprep.subr.bf16.mxu0 0
      %870 = vmatpush1.bf16.msra.mxu0 0
      %871 = vmatprep.subr.bf16.mxu0 0
      %872 = vmatpush1.bf16.msra.mxu0 0
      %873 = vmatprep.subr.bf16.mxu0 0
      %874 = vmatpush1.bf16.msra.mxu0 0
      %875 = vmatprep.subr.bf16.mxu0 0
      %876 = vmatpush1.bf16.msra.mxu0 0
      %877 = vmatprep.subr.bf16.mxu0 0
      %878 = vmatpush1.bf16.msra.mxu0 0
      %879 = vmatprep.subr.bf16.mxu0 0
      %880 = vmatpush1.bf16.msra.mxu0 0
      %881 = vmatprep.subr.bf16.mxu0 0
      %882 = vmatpush1.bf16.msra.mxu0 0
      %883 = vmatprep.mubr.bf16.mxu0 0
      %884 = vmatmul.mubr.bf16.gmra.mrb[0].mxu0 %v825
      %v885 = vpop.f32.mrb[0].mxu0
      %v886 = vadd.f32 %v822, %v885
      %v887 = vpop.f32.mrb[0].mxu0
      %v888 = vpop.f32.mrb[0].mxu0
      %v889 = vadd.f32 %v822, %v888
      %v890 = vpop.f32.mrb[0].mxu0
      %891 = vmatprep.mubr.bf16.mxu0 0
      %892 = vmatmul.mubr.bf16.gmra.mrb[0].mxu0 %v828
      %v893 = vpop.f32.mrb[0].mxu0
      %v894 = vadd.f32 %v822, %v893
      %v895 = vpop.f32.mrb[0].mxu0
      %v896 = vpop.f32.mrb[0].mxu0
      %v897 = vadd.f32 %v822, %v896
      %v898 = vpop.f32.mrb[0].mxu0
      %899 = vmatprep.mubr.bf16.mxu0 0
      %900 = vmatmul.mubr.bf16.gmra.mrb[0].mxu0 %v831
      %v901 = vpop.f32.mrb[0].mxu0
      %v902 = vadd.f32 %v822, %v901
      %v903 = vpop.f32.mrb[0].mxu0
      %v904 = vpop.f32.mrb[0].mxu0
      %v905 = vadd.f32 %v822, %v904
      %v906 = vpop.f32.mrb[0].mxu0
      %907 = vmatprep.mubr.bf16.mxu0 0
      %908 = vmatmul.mubr.bf16.gmra.mrb[0].mxu0 %v834
      %v909 = vpop.f32.mrb[0].mxu0
      %v910 = vadd.f32 %v822, %v909
      %v911 = vpop.f32.mrb[0].mxu0
      %v912 = vpop.f32.mrb[0].mxu0
      %v913 = vadd.f32 %v822, %v912
      %v914 = vpop.f32.mrb[0].mxu0
      %915 = vmatprep.mubr.bf16.mxu0 0
      %916 = vmatmul.mubr.bf16.gmra.mrb[0].mxu0 %v837
      %v917 = vpop.f32.mrb[0].mxu0
      %v918 = vadd.f32 %v822, %v917
      %v919 = vpop.f32.mrb[0].mxu0
      %v920 = vpop.f32.mrb[0].mxu0
      %v921 = vadd.f32 %v822, %v920
      %v922 = vpop.f32.mrb[0].mxu0
      %923 = vmatprep.mubr.bf16.mxu0 0
      %924 = vmatmul.mubr.bf16.gmra.mrb[0].mxu0 %v840
      %v925 = vpop.f32.mrb[0].mxu0
      %v926 = vadd.f32 %v822, %v925
      %v927 = vpop.f32.mrb[0].mxu0
      %v928 = vpop.f32.mrb[0].mxu0
      %v929 = vadd.f32 %v822, %v928
      %v930 = vpop.f32.mrb[0].mxu0
      %931 = vmatprep.mubr.bf16.mxu0 0
      %932 = vmatmul.mubr.bf16.gmra.mrb[0].mxu0 %v843
      %v933 = vpop.f32.mrb[0].mxu0
      %v934 = vadd.f32 %v822, %v933
      %v935 = vpop.f32.mrb[0].mxu0
      %v936 = vpop.f32.mrb[0].mxu0
      %v937 = vadd.f32 %v822, %v936
      %v938 = vpop.f32.mrb[0].mxu0
      %939 = vmatprep.mubr.bf16.mxu0 0
      %940 = vmatmul.mubr.bf16.gmra.mrb[0].mxu0 %v846
      %v941 = vpop.f32.mrb[0].mxu0
      %v942 = vadd.f32 %v822, %v941
      %v943 = vpop.f32.mrb[0].mxu0
      %v944 = vpop.f32.mrb[0].mxu0
      %v945 = vadd.f32 %v822, %v944
      %v946 = vpop.f32.mrb[0].mxu0
      %947 = vdwg.mxu0
      %v948 = vadd.f32 %v886, %v353
      %v949 = vadd.f32 %v889, %v354
      %v950 = vadd.f32 %v894, %v355
      %v951 = vadd.f32 %v897, %v356
      %v952 = vadd.f32 %v902, %v357
      %v953 = vadd.f32 %v905, %v358
      %v954 = vadd.f32 %v910, %v359
      %v955 = vadd.f32 %v913, %v360
      %v956 = vadd.f32 %v918, %v361
      %v957 = vadd.f32 %v921, %v362
      %v958 = vadd.f32 %v926, %v363
      %v959 = vadd.f32 %v929, %v364
      %v960 = vadd.f32 %v934, %v365
      %v961 = vadd.f32 %v937, %v366
      %v962 = vadd.f32 %v942, %v367
      %v963 = vadd.f32 %v945, %v368
      %964 = vst.msk [vmem:[%s350] sm:$0xff] %vm385, %v948
      %965 = vst.msk [vmem:[%s350 + $0x8] sm:$0xff] %vm385, %v949
      %966 = vst.msk [vmem:[%s350 + $0x10] sm:$0xff] %vm385, %v950
      %967 = vst.msk [vmem:[%s350 + $0x18] sm:$0xff] %vm385, %v951
      %968 = vst.msk [vmem:[%s350 + $0x20] sm:$0xff] %vm385, %v952
      %969 = vst.msk [vmem:[%s350 + $0x28] sm:$0xff] %vm385, %v953
      %970 = vst.msk [vmem:[%s350 + $0x30] sm:$0xff] %vm385, %v954
      %971 = vst.msk [vmem:[%s350 + $0x38] sm:$0xff] %vm385, %v955
      %972 = vst.msk [vmem:[%s350 + $0x40] sm:$0xff] %vm385, %v956
      %973 = vst.msk [vmem:[%s350 + $0x48] sm:$0xff] %vm385, %v957
      %974 = vst.msk [vmem:[%s350 + $0x50] sm:$0xff] %vm385, %v958
      %975 = vst.msk [vmem:[%s350 + $0x58] sm:$0xff] %vm385, %v959
      %976 = vst.msk [vmem:[%s350 + $0x60] sm:$0xff] %vm385, %v960
      %977 = vst.msk [vmem:[%s350 + $0x68] sm:$0xff] %vm385, %v961
      %978 = vst.msk [vmem:[%s350 + $0x70] sm:$0xff] %vm385, %v962
      %979 = vst.msk [vmem:[%s350 + $0x78] sm:$0xff] %vm385, %v963
      %s980 = smul.u32 16, %s23
      %p981 = scmp.lt.s32.totalorder %s22, 1
      %s982 = scalar_select %p981, %s22, 1
      %p983 = scmp.lt.s32.totalorder %s980, 31
      %s984 = scalar_select %p983, %s980, 31
      %s985 = smul.addr %s982, 32
      %s986 = sadd.s32 %s984, %s985
      %s987 = smul.addr %s986, 8
      %s988 = scalar_lea.vmem %s7, %s987
      // Predicated region
      $region49: #{nonlocal_block_pallas.3} parent=47 // pred_check
        %p989 = pneg %p214
      $region50: #{nonlocal_block_pallas.3} parent=47 // pred_check_branch
        %991 = sbr.rel (%p989) target = $region52
      $region51: #{nonlocal_block_pallas.3} parent=47 // pred_region
        %s992 = smul.u32 16, %s23
      $region52: #{nonlocal_block_pallas.3} parent=47 // pred_fallthru
        _
    $region48: #{nonlocal_block_pallas.3} parent=5 // pred_fallthru
      _
    %p993 = scmp.le.s32.totalorder 2, %s13
    // Predicated region
    $region53: #{nonlocal_block_pallas.3} parent=5 // pred_check
      %p994 = pneg %p993
    $region54: #{nonlocal_block_pallas.3} parent=5 // pred_check_branch
      %996 = sbr.rel (%p994) target = $region56
    $region55: #{nonlocal_block_pallas.3} parent=5 // pred_region
      %s997 = ssub.s32 %s13, 2
      // Predicated region
      $region57: #{nonlocal_block_pallas.3} parent=55 // pred_check
        %p998 = pneg %p220
      $region58: #{nonlocal_block_pallas.3} parent=55 // pred_check_branch
        %1000 = sbr.rel (%p998) target = $region60
      $region59: #{nonlocal_block_pallas.3} parent=55 // pred_region
        %s1001 = smul.u32 16, %s25
        %p1002 = scmp.lt.s32.totalorder %s24, 1
        %s1003 = scalar_select %p1002, %s24, 1
        %p1004 = scmp.lt.s32.totalorder %s1001, 31
        %s1005 = scalar_select %p1004, %s1001, 31
        %s1006 = smul.addr %s1003, 32
        %s1007 = sadd.s32 %s1005, %s1006
        %s1008 = smul.addr %s1007, 8
        %s1009 = scalar_lea.vmem %s7, %s1008
      $region60: #{nonlocal_block_pallas.3} parent=55 // pred_fallthru
        _
    $region56: #{nonlocal_block_pallas.3} parent=5 // pred_fallthru
      _
  $region6: #{nonlocal_block_pallas.3} parent=0 // loop_footer
    %s17 = sadd.s32 1, %s13
  $region7: #{nonlocal_block_pallas.3} parent=0 // loop_footer_branch
    %12 = sbr.rel target = $region3
  $region8: #{nonlocal_block_pallas.3} parent=0 // loop_exit
    _

</llo_original>
